<compile_context>
chip_gen: v6e
topology: v6e:2x2x1
jax: 0.10.0
libtpu: 0.0.40
codegen_flags: <defaults>
</compile_context>

<pallas_src>
import functools

import jax
import jax.numpy as jnp
import numpy as np
from jax.experimental import pallas as pl
from jax.experimental.pallas import tpu as pltpu


def _round_up(x, m):
    return ((x + m - 1) // m) * m


def _vmem_capacity_bytes():
    try:
        return int(pltpu.get_tpu_info().vmem_capacity_bytes)
    except Exception:
        return 64 * 1024 * 1024  # conservative (v7x per-TC) fallback


def _choose_gcn_tile(n, f_out_p, out_bytes, budget):
    """Largest row tile whose A/XW/out buffers fit the VMEM budget."""
    n128 = _round_up(n, 128)
    for tm in (1024, 512, 256, 128):
        if tm > n128:
            continue
        n_p = _round_up(n, tm)
        est = (2 * tm * n_p * 4            # A double buffer (f32 streamed)
               + tm * n_p * 2              # in-kernel bf16 cast of the A tile
               + 2 * n_p * f_out_p * 2     # XW double buffer (bf16)
               + 2 * tm * f_out_p * out_bytes)  # output double buffer
        if est <= budget:
            return tm, n_p
    return 128, _round_up(n, 128)


# --------------------------------------------------------------------------
# Kernel 1: sequential GRU evolution of the GCN weight matrix Q.
#   wg = concat([Wu+Uu, Wr+Ur, Wh], axis=0), each gate padded to F_in_r rows.
#   bg = concat([bu, br, bh], axis=0) with the same per-gate row padding.
#   Recurrent state kept in f32 VMEM scratch; Q_seq emitted in bf16.
# --------------------------------------------------------------------------
def q_evolve_kernel(f_in, f_in_r, t_chunk,
                    wg_ref, bg_ref, uh_ref, q0_ref, q_out_ref, q_scr):
    @pl.when(pl.program_id(0) == 0)
    def _():
        q_scr[...] = q0_ref[...]

    wg = wg_ref[...]
    bg = bg_ref[...]
    uh = uh_ref[...]

    def body(i, carry):
        q = q_scr[...]  # prev_Q, (F_in, F_out_p) f32
        # Fused gate matmul: one MXU push for update / reset / Wh@q.
        g = jnp.dot(wg, q, preferred_element_type=jnp.float32) + bg
        upd = jax.nn.sigmoid(g[0:f_in])
        rst = jax.nn.sigmoid(g[f_in_r:f_in_r + f_in])
        hcap = jnp.tanh(
            g[2 * f_in_r:2 * f_in_r + f_in]
            + jnp.dot(uh, rst * q, preferred_element_type=jnp.float32))
        q_new = (1.0 - upd) * q + upd * hcap
        q_scr[...] = q_new
        q_out_ref[i] = q_new.astype(q_out_ref.dtype)
        return carry

    jax.lax.fori_loop(0, t_chunk, body, 0)


# --------------------------------------------------------------------------
# Kernel 2: XW_t = X_t @ Q_t, fully parallel over (t, row tile).
# X streamed f32, cast to bf16 in-kernel; output bf16.
# --------------------------------------------------------------------------
def xw_kernel(x_ref, q_ref, xw_ref):
    x = x_ref[0].astype(jnp.bfloat16)
    xw = jnp.dot(x, q_ref[0], preferred_element_type=jnp.float32)
    xw_ref[0] = xw.astype(xw_ref.dtype)


# --------------------------------------------------------------------------
# Kernel 3: GCN step  out = relu(A_tile @ XW_t), fully parallel grid.
# A streamed f32, cast to bf16 in-kernel right before the dot.
# --------------------------------------------------------------------------
def gcn_kernel(a_ref, xw_ref, o_ref):
    a = a_ref[0].astype(jnp.bfloat16)
    y = jnp.dot(a, xw_ref[0], preferred_element_type=jnp.float32)
    o_ref[0] = jnp.maximum(y, 0.0).astype(o_ref.dtype)  # ReLU


def grcu_forward(A_seq, X_seq, params, out_dtype=jnp.float32):
    """A_seq: (T,N,N) f32, X_seq: (T,N,F_in) f32. Returns (T,N,F_out)."""
    T, N, _ = A_seq.shape
    F_in = X_seq.shape[-1]
    F_out = params["q0"].shape[-1]

    # ---- pad F_out to a lane-dense multiple of 128 (padded columns stay 0) --
    F_out_p = _round_up(F_out, 128)
    pad_c = F_out_p - F_out
    padc = (lambda m: jnp.pad(m, ((0, 0), (0, pad_c)))) if pad_c else (lambda m: m)

    # ---- per-gate row padding to a multiple of 8 (sublane-aligned slices) ---
    F_in_r = _round_up(F_in, 8)
    pad_r = F_in_r - F_in
    padr = (lambda m: jnp.pad(m, ((0, pad_r), (0, 0)))) if pad_r else (lambda m: m)

    q0 = padc(params["q0"])
    # z_topk == prev_Q in egcn_o, so W@q + U@q = (W+U)@q — fuse the gate weights.
    wg = jnp.concatenate(
        [padr(params["wu"] + params["uu"]),
         padr(params["wr"] + params["ur"]),
         padr(params["wh"])], axis=0)                       # (3*F_in_r, F_in)
    bg = jnp.concatenate(
        [padr(padc(params["bu"])),
         padr(padc(params["br"])),
         padr(padc(params["bh"]))], axis=0)                 # (3*F_in_r, F_out_p)
    uh = params["uh"]

    # ---- Kernel 1: Q evolution (T collapsed into an in-kernel loop) ---------
    bytes_per_t = F_in * F_out_p * 2  # bf16 output block per step
    Tc = max(1, min(T, (2 * 1024 * 1024) // max(bytes_per_t, 1)))
    n_chunks = pl.cdiv(T, Tc)
    T_p = n_chunks * Tc  # trailing (T_p - T) steps compute unused garbage only

    const2 = lambda shape: pl.BlockSpec(shape, lambda c: (0, 0))
    q_grid = pltpu.PrefetchScalarGridSpec(
        num_scalar_prefetch=0,
        grid=(n_chunks,),
        in_specs=[
            const2((3 * F_in_r, F_in)),       # packed gate weights
            const2((3 * F_in_r, F_out_p)),    # packed biases
            const2((F_in, F_in)),             # U_htilda
            const2((F_in, F_out_p)),          # GCN_init_weights
        ],
        out_specs=pl.BlockSpec((Tc, F_in, F_out_p), lambda c: (c, 0, 0)),
        scratch_shapes=[pltpu.VMEM((F_in, F_out_p), jnp.float32)],
    )
    q_seq = pl.pallas_call(
        functools.partial(q_evolve_kernel, F_in, F_in_r, Tc),
        out_shape=jax.ShapeDtypeStruct((T_p, F_in, F_out_p), jnp.bfloat16),
        grid_spec=q_grid,
        compiler_params=pltpu.CompilerParams(
            dimension_semantics=("arbitrary",)),   # Q carries across chunks
    )(wg, bg, uh, q0)

    # ---- generation-aware row tile / VMEM limit ------------------------------
    vmem_cap = _vmem_capacity_bytes()
    vmem_limit = min(int(vmem_cap * 0.85), 96 * 1024 * 1024)
    out_bytes = jnp.dtype(out_dtype).itemsize
    tm, N_p = _choose_gcn_tile(N, F_out_p, out_bytes, int(vmem_limit * 0.8))
    R = N_p // tm

    if N_p != N:
        A_in = jnp.pad(A_seq, ((0, 0), (0, N_p - N), (0, N_p - N)))
        X_in = jnp.pad(X_seq, ((0, 0), (0, N_p - N), (0, 0)))
    else:
        A_in, X_in = A_seq, X_seq

    # ---- Kernel 2: XW = X @ Q for all t (purely parallel) -------------------
    xw_grid = pltpu.PrefetchScalarGridSpec(
        num_scalar_prefetch=0,
        grid=(T, R),
        in_specs=[
            pl.BlockSpec((1, tm, F_in), lambda t, r: (t, r, 0)),       # X tile
            pl.BlockSpec((1, F_in, F_out_p), lambda t, r: (t, 0, 0)),  # Q_t
        ],
        out_specs=pl.BlockSpec((1, tm, F_out_p), lambda t, r: (t, r, 0)),
    )
    xw = pl.pallas_call(
        xw_kernel,
        out_shape=jax.ShapeDtypeStruct((T, N_p, F_out_p), jnp.bfloat16),
        grid_spec=xw_grid,
        compiler_params=pltpu.CompilerParams(
            dimension_semantics=("parallel", "parallel")),
    )(X_in, q_seq)

    # ---- Kernel 3: out = relu(A @ XW), both grid axes parallel --------------
    gcn_grid = pltpu.PrefetchScalarGridSpec(
        num_scalar_prefetch=0,
        grid=(T, R),
        in_specs=[
            pl.BlockSpec((1, tm, N_p), lambda t, r: (t, r, 0)),        # A tile
            pl.BlockSpec((1, N_p, F_out_p), lambda t, r: (t, 0, 0)),   # XW_t
        ],
        out_specs=pl.BlockSpec((1, tm, F_out_p), lambda t, r: (t, r, 0)),
    )
    out = pl.pallas_call(
        gcn_kernel,
        out_shape=jax.ShapeDtypeStruct((T, N_p, F_out_p), out_dtype),
        grid_spec=gcn_grid,
        compiler_params=pltpu.CompilerParams(
            dimension_semantics=("parallel", "parallel"),
            vmem_limit_bytes=vmem_limit),
    )(A_in, xw)

    return out[:, :N, :F_out]


def grcu_reference(A_seq, X_seq, params):
    """Pure-JAX f32 reference matching the PyTorch forward semantics."""
    q = params["q0"]
    outs = []
    for t in range(A_seq.shape[0]):
        upd = jax.nn.sigmoid(params["wu"] @ q + params["uu"] @ q + params["bu"])
        rst = jax.nn.sigmoid(params["wr"] @ q + params["ur"] @ q + params["br"])
        hcap = jnp.tanh(params["wh"] @ q + params["uh"] @ (rst * q) + params["bh"])
        q = (1.0 - upd) * q + upd * hcap
        y = jnp.maximum(A_seq[t] @ (X_seq[t] @ q), 0.0)
        outs.append(y)
    return jnp.stack(outs)


def init_params(key, F_in, F_out):
    """Deterministic init matching the PyTorch reset_param scheme."""
    ks = jax.random.split(key, 7)
    stdv_w = 1.0 / np.sqrt(F_in)   # W/U are (rows, rows); stdv = 1/sqrt(size(1))
    stdv_q = 1.0 / np.sqrt(F_out)  # GCN_init_weights: stdv = 1/sqrt(out_feats)

    def u(k, shape, s):
        return jax.random.uniform(k, shape, jnp.float32, minval=-s, maxval=s)

    return {
        "wu": u(ks[0], (F_in, F_in), stdv_w),
        "uu": u(ks[1], (F_in, F_in), stdv_w),
        "bu": jnp.zeros((F_in, F_out), jnp.float32),
        "wr": u(ks[2], (F_in, F_in), stdv_w),
        "ur": u(ks[3], (F_in, F_in), stdv_w),
        "br": jnp.zeros((F_in, F_out), jnp.float32),
        "wh": u(ks[4], (F_in, F_in), stdv_w),
        "uh": u(ks[5], (F_in, F_in), stdv_w),
        "bh": jnp.zeros((F_in, F_out), jnp.float32),
        "q0": u(ks[6], (F_in, F_out), stdv_q),
    }


if __name__ == "__main__":
    # Small shapes consistent with the module (T graphs, N nodes, feats).
    T, N, F_in, F_out = 4, 256, 32, 128
    key = jax.random.PRNGKey(0)
    k_a, k_x, k_p = jax.random.split(key, 3)

    # Row-normalized dense adjacency (Ahat), node embeddings.
    A_raw = jax.random.uniform(k_a, (T, N, N), jnp.float32)
    A_seq = A_raw / jnp.sum(A_raw, axis=-1, keepdims=True)
    X_seq = jax.random.normal(k_x, (T, N, F_in), jnp.float32)

    params = init_params(k_p, F_in, F_out)

    fwd = jax.jit(grcu_forward)
    out = jax.block_until_ready(fwd(A_seq, X_seq, params))

    ref = grcu_reference(A_seq, X_seq, params)
    # bf16 A/X/Q/XW in the MXU matmuls (f32 accumulation) => loosened tolerance.
    np.testing.assert_allclose(np.asarray(out), np.asarray(ref),
                               rtol=5e-2, atol=2e-2)

    print("KERNEL_OK")
</pallas_src>

<mosaic_0001>
module attributes {stable_mosaic.version = 11 : i64} {
  func.func @gcn_kernel(%arg0: i32, %arg1: i32, %arg2: memref<1x256x256xf32, #tpu.memory_space<vmem>>, %arg3: memref<1x256x128xbf16, #tpu.memory_space<vmem>>, %arg4: memref<1x256x128xf32, #tpu.memory_space<vmem>>) attributes {dimension_semantics = [#tpu.dimension_semantics<parallel>, #tpu.dimension_semantics<parallel>], iteration_bounds = array<i64: 4, 1>, scalar_prefetch = 0 : i64, scratch_operands = 0 : i64, tpu.core_type = #tpu.core_type<tc>, window_params = [{transform_indices = @transform_0, window_bounds = array<i64: 1, 256, 256>}, {transform_indices = @transform_1, window_bounds = array<i64: 1, 256, 128>}, {transform_indices = @transform_2, window_bounds = array<i64: 1, 256, 128>}]} {
    %c0 = arith.constant 0 : index
    %c0_0 = arith.constant 0 : index
    %c0_1 = arith.constant 0 : index
    %0 = vector.load %arg2[%c0, %c0_0, %c0_1] : memref<1x256x256xf32, #tpu.memory_space<vmem>>, vector<1x256x256xf32>
    %1 = vector.shape_cast %0 : vector<1x256x256xf32> to vector<256x256xf32>
    %2 = arith.truncf %1 : vector<256x256xf32> to vector<256x256xbf16>
    %c0_2 = arith.constant 0 : index
    %c0_3 = arith.constant 0 : index
    %c0_4 = arith.constant 0 : index
    %3 = vector.load %arg3[%c0_2, %c0_3, %c0_4] : memref<1x256x128xbf16, #tpu.memory_space<vmem>>, vector<1x256x128xbf16>
    %4 = vector.shape_cast %3 : vector<1x256x128xbf16> to vector<256x128xbf16>
    %cst = arith.constant dense<0.000000e+00> : vector<256x128xf32>
    %5 = tpu.matmul %2, %4, %cst {dimension_numbers = #tpu.dot_dimension_numbers<[1], [0], [0], [1], [0, 0, 1, 1], [], []>} : vector<256x256xbf16>, vector<256x128xbf16>, vector<256x128xf32> -> vector<256x128xf32>
    %cst_5 = arith.constant 0.000000e+00 : f32
    %6 = vector.broadcast %cst_5 : f32 to vector<256x128xf32>
    %7 = arith.maximumf %5, %6 : vector<256x128xf32>
    %c0_6 = arith.constant 0 : index
    %c0_7 = arith.constant 0 : index
    %c0_8 = arith.constant 0 : index
    %8 = vector.load %arg4[%c0_6, %c0_7, %c0_8] : memref<1x256x128xf32, #tpu.memory_space<vmem>>, vector<1x256x128xf32>
    %9 = vector.shape_cast %8 : vector<1x256x128xf32> to vector<256x128xf32>
    %10 = vector.shape_cast %7 : vector<256x128xf32> to vector<1x256x128xf32>
    tpu.vector_store %arg4[%c0_6, %c0_7, %c0_8], %10 {strides = array<i32>} : memref<1x256x128xf32, #tpu.memory_space<vmem>>, vector<1x256x128xf32>,
    return
  }
  func.func @transform_0(%arg0: i32, %arg1: i32) -> (i32, i32, i32) {
    %c0_i32 = arith.constant 0 : i32
    %c0_i32_0 = arith.constant 0 : i32
    return %arg0, %arg1, %c0_i32 : i32, i32, i32
  }
  func.func @transform_1(%arg0: i32, %arg1: i32) -> (i32, i32, i32) {
    %c0_i32 = arith.constant 0 : i32
    %c0_i32_0 = arith.constant 0 : i32
    %c0_i32_1 = arith.constant 0 : i32
    return %arg0, %c0_i32, %c0_i32_0 : i32, i32, i32
  }
  func.func @transform_2(%arg0: i32, %arg1: i32) -> (i32, i32, i32) {
    %c0_i32 = arith.constant 0 : i32
    %c0_i32_0 = arith.constant 0 : i32
    return %arg0, %arg1, %c0_i32 : i32, i32, i32
  }
}

module attributes {stable_mosaic.version = 11 : i64} {
  func.func @xw_kernel(%arg0: i32, %arg1: i32, %arg2: memref<1x256x32xf32, #tpu.memory_space<vmem>>, %arg3: memref<1x32x128xbf16, #tpu.memory_space<vmem>>, %arg4: memref<1x256x128xbf16, #tpu.memory_space<vmem>>) attributes {dimension_semantics = [#tpu.dimension_semantics<parallel>, #tpu.dimension_semantics<parallel>], iteration_bounds = array<i64: 4, 1>, scalar_prefetch = 0 : i64, scratch_operands = 0 : i64, tpu.core_type = #tpu.core_type<tc>, window_params = [{transform_indices = @transform_0, window_bounds = array<i64: 1, 256, 32>}, {transform_indices = @transform_1, window_bounds = array<i64: 1, 32, 128>}, {transform_indices = @transform_2, window_bounds = array<i64: 1, 256, 128>}]} {
    %c0 = arith.constant 0 : index
    %c0_0 = arith.constant 0 : index
    %c0_1 = arith.constant 0 : index
    %0 = vector.load %arg2[%c0, %c0_0, %c0_1] : memref<1x256x32xf32, #tpu.memory_space<vmem>>, vector<1x256x32xf32>
    %1 = vector.shape_cast %0 : vector<1x256x32xf32> to vector<256x32xf32>
    %2 = arith.truncf %1 : vector<256x32xf32> to vector<256x32xbf16>
    %c0_2 = arith.constant 0 : index
    %c0_3 = arith.constant 0 : index
    %c0_4 = arith.constant 0 : index
    %3 = vector.load %arg3[%c0_2, %c0_3, %c0_4] : memref<1x32x128xbf16, #tpu.memory_space<vmem>>, vector<1x32x128xbf16>
    %4 = vector.shape_cast %3 : vector<1x32x128xbf16> to vector<32x128xbf16>
    %cst = arith.constant dense<0.000000e+00> : vector<256x128xf32>
    %5 = tpu.matmul %2, %4, %cst {dimension_numbers = #tpu.dot_dimension_numbers<[1], [0], [0], [1], [0, 0, 1, 1], [], []>} : vector<256x32xbf16>, vector<32x128xbf16>, vector<256x128xf32> -> vector<256x128xf32>
    %6 = arith.truncf %5 : vector<256x128xf32> to vector<256x128xbf16>
    %c0_5 = arith.constant 0 : index
    %c0_6 = arith.constant 0 : index
    %c0_7 = arith.constant 0 : index
    %7 = vector.load %arg4[%c0_5, %c0_6, %c0_7] : memref<1x256x128xbf16, #tpu.memory_space<vmem>>, vector<1x256x128xbf16>
    %8 = vector.shape_cast %7 : vector<1x256x128xbf16> to vector<256x128xbf16>
    %9 = vector.shape_cast %6 : vector<256x128xbf16> to vector<1x256x128xbf16>
    tpu.vector_store %arg4[%c0_5, %c0_6, %c0_7], %9 {strides = array<i32>} : memref<1x256x128xbf16, #tpu.memory_space<vmem>>, vector<1x256x128xbf16>,
    return
  }
  func.func @transform_0(%arg0: i32, %arg1: i32) -> (i32, i32, i32) {
    %c0_i32 = arith.constant 0 : i32
    %c0_i32_0 = arith.constant 0 : i32
    return %arg0, %arg1, %c0_i32 : i32, i32, i32
  }
  func.func @transform_1(%arg0: i32, %arg1: i32) -> (i32, i32, i32) {
    %c0_i32 = arith.constant 0 : i32
    %c0_i32_0 = arith.constant 0 : i32
    %c0_i32_1 = arith.constant 0 : i32
    return %arg0, %c0_i32, %c0_i32_0 : i32, i32, i32
  }
  func.func @transform_2(%arg0: i32, %arg1: i32) -> (i32, i32, i32) {
    %c0_i32 = arith.constant 0 : i32
    %c0_i32_0 = arith.constant 0 : i32
    return %arg0, %arg1, %c0_i32 : i32, i32, i32
  }
}

module attributes {stable_mosaic.version = 11 : i64} {
  func.func @q_evolve_kernel(%arg0: i32, %arg1: memref<96x32xf32, #tpu.memory_space<vmem>>, %arg2: memref<96x128xf32, #tpu.memory_space<vmem>>, %arg3: memref<32x32xf32, #tpu.memory_space<vmem>>, %arg4: memref<32x128xf32, #tpu.memory_space<vmem>>, %arg5: memref<4x32x128xbf16, #tpu.memory_space<vmem>>, %arg6: memref<32x128xf32, #tpu.memory_space<vmem>>) attributes {dimension_semantics = [#tpu.dimension_semantics<arbitrary>], iteration_bounds = array<i64: 1>, scalar_prefetch = 0 : i64, scratch_operands = 1 : i64, tpu.core_type = #tpu.core_type<tc>, window_params = [{pipeline_mode = #tpu.pipeline_mode<synchronous>, transform_indices = @transform_0, window_bounds = array<i64: 96, 32>}, {pipeline_mode = #tpu.pipeline_mode<synchronous>, transform_indices = @transform_1, window_bounds = array<i64: 96, 128>}, {pipeline_mode = #tpu.pipeline_mode<synchronous>, transform_indices = @transform_2, window_bounds = array<i64: 32, 32>}, {pipeline_mode = #tpu.pipeline_mode<synchronous>, transform_indices = @transform_3, window_bounds = array<i64: 32, 128>}, {transform_indices = @transform_4, window_bounds = array<i64: 4, 32, 128>}]} {
    %c0_i32 = arith.constant 0 : i32
    %0 = arith.cmpi eq, %arg0, %c0_i32 : i32
    %1 = arith.extui %0 : i1 to i32
    %c0_i32_0 = arith.constant 0 : i32
    %2 = arith.cmpi ne, %1, %c0_i32_0 : i32
    scf.if %2 {
      %c0_8 = arith.constant 0 : index
      %c0_9 = arith.constant 0 : index
      %7 = vector.load %arg4[%c0_8, %c0_9] : memref<32x128xf32, #tpu.memory_space<vmem>>, vector<32x128xf32>
      %c0_10 = arith.constant 0 : index
      %c0_11 = arith.constant 0 : index
      %8 = vector.load %arg6[%c0_10, %c0_11] : memref<32x128xf32, #tpu.memory_space<vmem>>, vector<32x128xf32>
      tpu.vector_store %arg6[%c0_10, %c0_11], %7 {strides = array<i32>} : memref<32x128xf32, #tpu.memory_space<vmem>>, vector<32x128xf32>,
    } else {
    }
    %c0 = arith.constant 0 : index
    %c0_1 = arith.constant 0 : index
    %3 = vector.load %arg1[%c0, %c0_1] : memref<96x32xf32, #tpu.memory_space<vmem>>, vector<96x32xf32>
    %c0_2 = arith.constant 0 : index
    %c0_3 = arith.constant 0 : index
    %4 = vector.load %arg2[%c0_2, %c0_3] : memref<96x128xf32, #tpu.memory_space<vmem>>, vector<96x128xf32>
    %c0_4 = arith.constant 0 : index
    %c0_5 = arith.constant 0 : index
    %5 = vector.load %arg3[%c0_4, %c0_5] : memref<32x32xf32, #tpu.memory_space<vmem>>, vector<32x32xf32>
    %c0_i32_6 = arith.constant 0 : i32
    %c4_i32 = arith.constant 4 : i32
    %6 = arith.addi %c0_i32_6, %c4_i32 : i32
    %c1_i32 = arith.constant 1 : i32
    scf.for %arg7 = %c0_i32_6 to %6 step %c1_i32  : i32 {
      %c0_8 = arith.constant 0 : index
      %c0_9 = arith.constant 0 : index
      %7 = vector.load %arg6[%c0_8, %c0_9] : memref<32x128xf32, #tpu.memory_space<vmem>>, vector<32x128xf32>
      %cst = arith.constant dense<0.000000e+00> : vector<96x128xf32>
      %8 = tpu.matmul %3, %7, %cst {dimension_numbers = #tpu.dot_dimension_numbers<[1], [0], [0], [1], [0, 0, 1, 1], [], []>} : vector<96x32xf32>, vector<32x128xf32>, vector<96x128xf32> -> vector<96x128xf32>
      %9 = arith.addf %8, %4 : vector<96x128xf32>
      %10 = vector.extract_strided_slice %9 {offsets = [0, 0], sizes = [32, 128], strides = [1, 1]} : vector<96x128xf32> to vector<32x128xf32>
      %11 = arith.negf %10 : vector<32x128xf32>
      %12 = math.exp %11 : vector<32x128xf32>
      %cst_10 = arith.constant 1.000000e+00 : f32
      %13 = vector.broadcast %cst_10 : f32 to vector<32x128xf32>
      %14 = arith.addf %13, %12 : vector<32x128xf32>
      %15 = arith.divf %13, %14 : vector<32x128xf32>
      %16 = vector.extract_strided_slice %9 {offsets = [32, 0], sizes = [32, 128], strides = [1, 1]} : vector<96x128xf32> to vector<32x128xf32>
      %17 = arith.negf %16 : vector<32x128xf32>
      %18 = math.exp %17 : vector<32x128xf32>
      %cst_11 = arith.constant 1.000000e+00 : f32
      %19 = vector.broadcast %cst_11 : f32 to vector<32x128xf32>
      %20 = arith.addf %19, %18 : vector<32x128xf32>
      %21 = arith.divf %19, %20 : vector<32x128xf32>
      %22 = vector.extract_strided_slice %9 {offsets = [64, 0], sizes = [32, 128], strides = [1, 1]} : vector<96x128xf32> to vector<32x128xf32>
      %23 = arith.mulf %21, %7 : vector<32x128xf32>
      %cst_12 = arith.constant dense<0.000000e+00> : vector<32x128xf32>
      %24 = tpu.matmul %5, %23, %cst_12 {dimension_numbers = #tpu.dot_dimension_numbers<[1], [0], [0], [1], [0, 0, 1, 1], [], []>} : vector<32x32xf32>, vector<32x128xf32>, vector<32x128xf32> -> vector<32x128xf32>
      %25 = arith.addf %22, %24 : vector<32x128xf32>
      %26 = math.tanh %25 : vector<32x128xf32>
      %cst_13 = arith.constant 1.000000e+00 : f32
      %27 = vector.broadcast %cst_13 : f32 to vector<32x128xf32>
      %28 = arith.subf %27, %15 : vector<32x128xf32>
      %29 = arith.mulf %28, %7 : vector<32x128xf32>
      %30 = arith.mulf %15, %26 : vector<32x128xf32>
      %31 = arith.addf %29, %30 : vector<32x128xf32>
      %c0_14 = arith.constant 0 : index
      %c0_15 = arith.constant 0 : index
      %32 = vector.load %arg6[%c0_14, %c0_15] : memref<32x128xf32, #tpu.memory_space<vmem>>, vector<32x128xf32>
      tpu.vector_store %arg6[%c0_14, %c0_15], %31 {strides = array<i32>} : memref<32x128xf32, #tpu.memory_space<vmem>>, vector<32x128xf32>,
      %33 = arith.truncf %31 : vector<32x128xf32> to vector<32x128xbf16>
      %34 = arith.index_cast %arg7 : i32 to index
      %c0_16 = arith.constant 0 : index
      %c0_17 = arith.constant 0 : index
      %35 = vector.load %arg5[%34, %c0_16, %c0_17] : memref<4x32x128xbf16, #tpu.memory_space<vmem>>, vector<1x32x128xbf16>
      %36 = vector.shape_cast %35 : vector<1x32x128xbf16> to vector<32x128xbf16>
      %37 = vector.shape_cast %33 : vector<32x128xbf16> to vector<1x32x128xbf16>
      tpu.vector_store %arg5[%34, %c0_16, %c0_17], %37 {strides = array<i32>} : memref<4x32x128xbf16, #tpu.memory_space<vmem>>, vector<1x32x128xbf16>,
    }
    %c4_i32_7 = arith.constant 4 : i32
    return
  }
  func.func @transform_0(%arg0: i32) -> (i32, i32) {
    %c0_i32 = arith.constant 0 : i32
    %c0_i32_0 = arith.constant 0 : i32
    %c0_i32_1 = arith.constant 0 : i32
    return %c0_i32, %c0_i32_0 : i32, i32
  }
  func.func @transform_1(%arg0: i32) -> (i32, i32) {
    %c0_i32 = arith.constant 0 : i32
    %c0_i32_0 = arith.constant 0 : i32
    %c0_i32_1 = arith.constant 0 : i32
    return %c0_i32, %c0_i32_0 : i32, i32
  }
  func.func @transform_2(%arg0: i32) -> (i32, i32) {
    %c0_i32 = arith.constant 0 : i32
    %c0_i32_0 = arith.constant 0 : i32
    %c0_i32_1 = arith.constant 0 : i32
    return %c0_i32, %c0_i32_0 : i32, i32
  }
  func.func @transform_3(%arg0: i32) -> (i32, i32) {
    %c0_i32 = arith.constant 0 : i32
    %c0_i32_0 = arith.constant 0 : i32
    %c0_i32_1 = arith.constant 0 : i32
    return %c0_i32, %c0_i32_0 : i32, i32
  }
  func.func @transform_4(%arg0: i32) -> (i32, i32, i32) {
    %c0_i32 = arith.constant 0 : i32
    %c0_i32_0 = arith.constant 0 : i32
    %c0_i32_1 = arith.constant 0 : i32
    return %arg0, %c0_i32, %c0_i32_0 : i32, i32, i32
  }
}

</mosaic_0001>

<llo_original>
// kernel: grcu_forward.4
$region0: #{grcu_forward.4}
  #allocation0 [shape = 'u32[]', space=smem, size = 0x4, offset = 0x4, fixed_abs, tag = 'smem constant byte address 0x4 - core index']
  #allocation1 [shape = 'u32[144,128]{1,0:T(1,128)}', space=vmem, size = 0x12000, scoped, tag = 'internal scratch']
  %s0 = inlined_call_operand.vmem [shape: f32[4,256,32], index: 0, kind: input, shape index: {}]
  %s1 = inlined_call_operand.vmem [shape: bf16[4,32,128], index: 1, kind: input, shape index: {}]
  %s2 = inlined_call_operand.vmem [shape: bf16[4,256,128], index: 2, kind: output, shape index: {}]
  %s3 = sld [smem:[#allocation0]]
  $region41: #{grcu_forward.4} parent=0
    _
  %s5 = ssub.s32 1, %s3
  %s6 = scalar_select 0, %s5, %s3
  loop: start=0, step=1, limit=6
  $region2: #{grcu_forward.4} parent=0 // loop_pre_header
    _
  $region3: #{grcu_forward.4} parent=0 // loop_header
    %s8 = sphi 0, %s12
    %p9 = scmp.ge.s32.totalorder %s8, 6
    %s15 = sphi 0, %s27
    %s16 = sphi 0, %s23
    %s17 = sphi 0, %s15
    %s18 = sphi 0, %s16
    %s19 = sphi 0, %s17
    %s20 = sphi 0, %s18
    %s32 = sphi 0, %s34
    %s35 = sphi 0, %s32
    %s36 = sphi 0, %s35
    %s52 = sphi 0, %s36
    %s58 = sphi 0, %s60
    %s61 = sphi 0, %s58
    %s62 = sphi 0, %s61
    %s78 = sphi 0, %s62
    %s86 = sphi 0, %s88
    %s89 = sphi 0, %s86
    %s90 = sphi 0, %s89
    %s106 = sphi 0, %s90
  $region4: #{grcu_forward.4} parent=0 // loop_header_branch
    %11 = sbr.rel (%p9) target = $region8
  $region5: #{grcu_forward.4} parent=0 // loop_body
    %s13 = ssub.s32 %s8, 1
    %s14 = ssub.s32 %s8, 2
    %s21 = sadd.s32 1, %s16
    %p22 = scmp.ge.s32.totalorder %s21, 1
    %s23 = scalar_select %p22, 0, %s21
    %s24 = sadd.s32 1, %s15
    %s25 = scalar_select %p22, %s24, %s15
    %p26 = scmp.ge.s32.totalorder %s25, 4
    %s27 = scalar_select %p26, 0, %s25
    %s28 = ssub.s32 %s15, %s27
    %s29 = ssub.s32 %s16, %s23
    %s30 = sor.u32 %s28, %s29
    %p31 = scmp.eq.s32.totalorder %s30, 0
    %s33 = sadd.s32 %s32, 1
    %s34 = scalar_select %p31, %s32, %s33
    %p37 = pneg %p31
    %p38 = scmp.eq.s32.totalorder %s8, 3
    %p39 = por %p37, %p38
    %p40 = scmp.ne.s32.totalorder %s32, %s35
    %p41 = scmp.eq.s32.totalorder %s8, 0
    %p42 = por %p40, %p41
    %p43 = scmp.ne.s32.totalorder %s32, %s35
    %p44 = scmp.eq.s32.totalorder %s13, 3
    %p45 = por %p43, %p44
    %p46 = scmp.ne.s32.totalorder %s35, %s36
    %p47 = scmp.eq.s32.totalorder %s13, 0
    %p48 = por %p46, %p47
    %p49 = scmp.ne.s32.totalorder %s35, %s36
    %p50 = scmp.eq.s32.totalorder %s14, 3
    %p51 = por %p49, %p50
    %p53 = scmp.ne.s32.totalorder %s36, %s52
    %p54 = scmp.eq.s32.totalorder %s14, 0
    %p55 = por %p53, %p54
    %s56 = ssub.s32 %s15, %s27
    %p57 = scmp.eq.s32.totalorder %s56, 0
    %s59 = sadd.s32 %s58, 1
    %s60 = scalar_select %p57, %s58, %s59
    %p63 = pneg %p57
    %p64 = scmp.eq.s32.totalorder %s8, 3
    %p65 = por %p63, %p64
    %p66 = scmp.ne.s32.totalorder %s58, %s61
    %p67 = scmp.eq.s32.totalorder %s8, 0
    %p68 = por %p66, %p67
    %p69 = scmp.ne.s32.totalorder %s58, %s61
    %p70 = scmp.eq.s32.totalorder %s13, 3
    %p71 = por %p69, %p70
    %p72 = scmp.ne.s32.totalorder %s61, %s62
    %p73 = scmp.eq.s32.totalorder %s13, 0
    %p74 = por %p72, %p73
    %p75 = scmp.ne.s32.totalorder %s61, %s62
    %p76 = scmp.eq.s32.totalorder %s14, 3
    %p77 = por %p75, %p76
    %p79 = scmp.ne.s32.totalorder %s62, %s78
    %p80 = scmp.eq.s32.totalorder %s14, 0
    %p81 = por %p79, %p80
    %s82 = ssub.s32 %s15, %s27
    %s83 = ssub.s32 %s16, %s23
    %s84 = sor.u32 %s82, %s83
    %p85 = scmp.eq.s32.totalorder %s84, 0
    %s87 = sadd.s32 %s86, 1
    %s88 = scalar_select %p85, %s86, %s87
    %p91 = pneg %p85
    %p92 = scmp.eq.s32.totalorder %s8, 3
    %p93 = por %p91, %p92
    %p94 = scmp.ne.s32.totalorder %s86, %s89
    %p95 = scmp.eq.s32.totalorder %s8, 0
    %p96 = por %p94, %p95
    %p97 = scmp.ne.s32.totalorder %s86, %s89
    %p98 = scmp.eq.s32.totalorder %s13, 3
    %p99 = por %p97, %p98
    %p100 = scmp.ne.s32.totalorder %s89, %s90
    %p101 = scmp.eq.s32.totalorder %s13, 0
    %p102 = por %p100, %p101
    %p103 = scmp.ne.s32.totalorder %s89, %s90
    %p104 = scmp.eq.s32.totalorder %s14, 3
    %p105 = por %p103, %p104
    %p107 = scmp.ne.s32.totalorder %s90, %s106
    %p108 = scmp.eq.s32.totalorder %s14, 0
    %p109 = por %p107, %p108
    %p110 = scmp.le.s32.totalorder 1, %s8
    %p111 = scmp.lt.s32.totalorder %s8, 5
    %p112 = pnand %p110, %p111
    %p113 = pneg %p112
    // Predicated region
    $region9: #{grcu_forward.4} parent=5 // pred_check
      _
    $region10: #{grcu_forward.4} parent=5 // pred_check_branch
      %115 = sbr.rel (%p112) target = $region12
    $region11: #{grcu_forward.4} parent=5 // pred_region
      %s116 = ssub.s32 %s8, 1
    $region12: #{grcu_forward.4} parent=5 // pred_fallthru
      _
    %p117 = scmp.lt.s32.totalorder %s8, 4
    // Predicated region
    $region13: #{grcu_forward.4} parent=5 // pred_check
      %p118 = pneg %p117
    $region14: #{grcu_forward.4} parent=5 // pred_check_branch
      %120 = sbr.rel (%p118) target = $region16
    $region15: #{grcu_forward.4} parent=5 // pred_region
      // Predicated region
      $region17: #{grcu_forward.4} parent=15 // pred_check
        %p121 = pneg %p42
      $region18: #{grcu_forward.4} parent=15 // pred_check_branch
        %123 = sbr.rel (%p121) target = $region20
      $region19: #{grcu_forward.4} parent=15 // pred_region
        %s124 = smul.u32 32, %s16
        %p125 = scmp.lt.s32.totalorder %s15, 3
        %s126 = scalar_select %p125, %s15, 3
        %p127 = scmp.lt.s32.totalorder %s124, 31
        %s128 = scalar_select %p127, %s124, 31
        %s129 = smul.addr %s126, 32
        %s130 = sadd.s32 %s128, %s129
        %s131 = smul.addr %s130, 8
        %s132 = scalar_lea.vmem %s0, %s131
        %s133 = smul.u32 32, %s16
      $region20: #{grcu_forward.4} parent=15 // pred_fallthru
        _
      // Predicated region
      $region21: #{grcu_forward.4} parent=15 // pred_check
        %p134 = pneg %p68
      $region22: #{grcu_forward.4} parent=15 // pred_check_branch
        %136 = sbr.rel (%p134) target = $region24
      $region23: #{grcu_forward.4} parent=15 // pred_region
        %p137 = scmp.lt.s32.totalorder %s15, 3
        %s138 = scalar_select %p137, %s15, 3
        %s139 = smul.addr %s138, 4
        %s140 = smul.addr %s139, 4
        %s141 = scalar_lea.vmem %s1, %s140
      $region24: #{grcu_forward.4} parent=15 // pred_fallthru
        _
    $region16: #{grcu_forward.4} parent=5 // pred_fallthru
      _
    %p142 = scmp.le.s32.totalorder 1, %s8
    %p143 = scmp.lt.s32.totalorder %s8, 5
    %p144 = pnand %p142, %p143
    %p145 = pneg %p144
    // Predicated region
    $region25: #{grcu_forward.4} parent=5 // pred_check
      _
    $region26: #{grcu_forward.4} parent=5 // pred_check_branch
      %147 = sbr.rel (%p144) target = $region28
    $region27: #{grcu_forward.4} parent=5 // pred_region
      %s148 = ssub.s32 %s8, 1
      %s149 = smul.u32 32, %s18
      %p150 = scmp.lt.s32.totalorder %s17, 3
      %s151 = scalar_select %p150, %s17, 3
      %p152 = scmp.lt.s32.totalorder %s149, 31
      %s153 = scalar_select %p152, %s149, 31
      %s154 = smul.addr %s151, 32
      %s155 = sadd.s32 %s153, %s154
      %s156 = smul.addr %s155, 8
      %s157 = scalar_lea.vmem %s0, %s156
      %p158 = pneg %p48
      %p159 = pneg %p45
      %p160 = scmp.lt.s32.totalorder %s17, 3
      %s161 = scalar_select %p160, %s17, 3
      %s162 = smul.addr %s161, 4
      %s163 = smul.addr %s162, 4
      %s164 = scalar_lea.vmem %s1, %s163
      %p165 = pneg %p74
      %p166 = pneg %p71
      %p167 = pneg %p102
      %p168 = pneg %p99
      %s169 = smul.u32 32, %s18
      %p170 = scmp.lt.s32.totalorder %s17, 3
      %s171 = scalar_select %p170, %s17, 3
      %p172 = scmp.lt.s32.totalorder %s169, 31
      %s173 = scalar_select %p172, %s169, 31
      %s174 = smul.addr %s171, 32
      %s175 = sadd.s32 %s173, %s174
      %s176 = smul.addr %s175, 4
      %s177 = scalar_lea.vmem %s2, %s176
      %s178 = smul.u32 32, %s18
      %p179 = scmp.lt.s32.totalorder %s17, 3
      %s180 = scalar_select %p179, %s17, 3
      %p181 = scmp.lt.s32.totalorder %s178, 31
      %s182 = scalar_select %p181, %s178, 31
      %s183 = smul.addr %s180, 32
      %s184 = sadd.s32 %s182, %s183
      %s185 = smul.addr %s184, 8
      %s186 = scalar_lea.vmem %s0, %s185
      %s187 = smul.u32 32, %s18
      %p188 = scmp.lt.s32.totalorder %s17, 3
      %s189 = scalar_select %p188, %s17, 3
      %s190 = smul.addr %s189, 4
      %s191 = smul.addr %s190, 4
      %s192 = scalar_lea.vmem %s1, %s191
      %s193 = smul.u32 32, %s18
      %p194 = scmp.lt.s32.totalorder %s17, 3
      %s195 = scalar_select %p194, %s17, 3
      %p196 = scmp.lt.s32.totalorder %s193, 31
      %s197 = scalar_select %p196, %s193, 31
      %s198 = smul.addr %s195, 32
      %s199 = sadd.s32 %s197, %s198
      %s200 = smul.addr %s199, 4
      %s201 = scalar_lea.vmem %s2, %s200
      %s202 = smul.u32 32, %s18
      %v204 = vld [vmem:[%s186] sm:$0xff]
      %v205 = vld [vmem:[%s186 + $0x8] sm:$0xff]
      %v206 = vld [vmem:[%s186 + $0x10] sm:$0xff]
      %v207 = vld [vmem:[%s186 + $0x18] sm:$0xff]
      %v208 = vld [vmem:[%s186 + $0x20] sm:$0xff]
      %v209 = vld [vmem:[%s186 + $0x28] sm:$0xff]
      %v210 = vld [vmem:[%s186 + $0x30] sm:$0xff]
      %v211 = vld [vmem:[%s186 + $0x38] sm:$0xff]
      %v212 = vld [vmem:[%s186 + $0x40] sm:$0xff]
      %v213 = vld [vmem:[%s186 + $0x48] sm:$0xff]
      %v214 = vld [vmem:[%s186 + $0x50] sm:$0xff]
      %v215 = vld [vmem:[%s186 + $0x58] sm:$0xff]
      %v216 = vld [vmem:[%s186 + $0x60] sm:$0xff]
      %v217 = vld [vmem:[%s186 + $0x68] sm:$0xff]
      %v218 = vld [vmem:[%s186 + $0x70] sm:$0xff]
      %v219 = vld [vmem:[%s186 + $0x78] sm:$0xff]
      %v220 = vld [vmem:[%s186 + $0x80] sm:$0xff]
      %v221 = vld [vmem:[%s186 + $0x88] sm:$0xff]
      %v222 = vld [vmem:[%s186 + $0x90] sm:$0xff]
      %v223 = vld [vmem:[%s186 + $0x98] sm:$0xff]
      %v224 = vld [vmem:[%s186 + $0xa0] sm:$0xff]
      %v225 = vld [vmem:[%s186 + $0xa8] sm:$0xff]
      %v226 = vld [vmem:[%s186 + $0xb0] sm:$0xff]
      %v227 = vld [vmem:[%s186 + $0xb8] sm:$0xff]
      %v228 = vld [vmem:[%s186 + $0xc0] sm:$0xff]
      %v229 = vld [vmem:[%s186 + $0xc8] sm:$0xff]
      %v230 = vld [vmem:[%s186 + $0xd0] sm:$0xff]
      %v231 = vld [vmem:[%s186 + $0xd8] sm:$0xff]
      %v232 = vld [vmem:[%s186 + $0xe0] sm:$0xff]
      %v233 = vld [vmem:[%s186 + $0xe8] sm:$0xff]
      %v234 = vld [vmem:[%s186 + $0xf0] sm:$0xff]
      %v235 = vld [vmem:[%s186 + $0xf8] sm:$0xff]
      %v236 = vpack.c.bf16 %v205, %v204
      %v237 = vpack.c.bf16 %v207, %v206
      %v238 = vpack.c.bf16 %v209, %v208
      %v239 = vpack.c.bf16 %v211, %v210
      %v240 = vpack.c.bf16 %v213, %v212
      %v241 = vpack.c.bf16 %v215, %v214
      %v242 = vpack.c.bf16 %v217, %v216
      %v243 = vpack.c.bf16 %v219, %v218
      %v244 = vpack.c.bf16 %v221, %v220
      %v245 = vpack.c.bf16 %v223, %v222
      %v246 = vpack.c.bf16 %v225, %v224
      %v247 = vpack.c.bf16 %v227, %v226
      %v248 = vpack.c.bf16 %v229, %v228
      %v249 = vpack.c.bf16 %v231, %v230
      %v250 = vpack.c.bf16 %v233, %v232
      %v251 = vpack.c.bf16 %v235, %v234
      %v252 = vld [vmem:[%s192] sm:$0xf]
      %v253 = vld [vmem:[%s192 + $0x4] sm:$0xf]
      %v254 = vld [vmem:[%s192 + $0x8] sm:$0xf]
      %v255 = vld [vmem:[%s192 + $0xc] sm:$0xf]
      %v260 = vunpack.c.l.b16 %v252
      %v261 = vunpack.c.l.b16 %v253
      %v262 = vunpack.c.l.b16 %v254
      %v263 = vunpack.c.l.b16 %v255
      %v264 = vpack.c.b16 %v261, %v260
      %v265 = vpack.c.b16 %v263, %v262
      %vm268 = vcmask 261120
      %v270 = vsel %vm268, %v236, 0
      %v273 = vsel %vm268, %v237, 0
      %v276 = vsel %vm268, %v238, 0
      %v279 = vsel %vm268, %v239, 0
      %v282 = vsel %vm268, %v240, 0
      %v285 = vsel %vm268, %v241, 0
      %v288 = vsel %vm268, %v242, 0
      %v291 = vsel %vm268, %v243, 0
      %v294 = vsel %vm268, %v244, 0
      %v297 = vsel %vm268, %v245, 0
      %v300 = vsel %vm268, %v246, 0
      %v303 = vsel %vm268, %v247, 0
      %v306 = vsel %vm268, %v248, 0
      %v309 = vsel %vm268, %v249, 0
      %v312 = vsel %vm268, %v250, 0
      %v315 = vsel %vm268, %v251, 0
      %317 = vmatprep.subr.bf16.mxu0 0
      %318 = vmatpush1.bf16.msra.mxu0 0
      %319 = vmatprep.subr.bf16.mxu0 0
      %320 = vmatpush1.bf16.msra.mxu0 0
      %321 = vmatprep.subr.bf16.mxu0 0
      %322 = vmatpush1.bf16.msra.mxu0 0
      %323 = vmatprep.subr.bf16.mxu0 0
      %324 = vmatpush1.bf16.msra.mxu0 0
      %325 = vmatprep.subr.bf16.mxu0 0
      %326 = vmatpush1.bf16.msra.mxu0 0
      %327 = vmatprep.subr.bf16.mxu0 0
      %328 = vmatpush1.bf16.msra.mxu0 0
      %329 = vmatprep.subr.bf16.mxu0 0
      %330 = vmatpush1.bf16.msra.mxu0 %v265
      %331 = vmatprep.subr.bf16.mxu0 0
      %332 = vmatpush1.bf16.msra.mxu0 %v264
      %333 = vmatprep.subr.bf16.mxu0 0
      %334 = vmatpush2.bf16.msra.mxu0 0
      %335 = vmatprep.subr.bf16.mxu0 0
      %336 = vmatpush2.bf16.msra.mxu0 0
      %337 = vmatprep.subr.bf16.mxu0 0
      %338 = vmatpush2.bf16.msra.mxu0 0
      %339 = vmatprep.subr.bf16.mxu0 0
      %340 = vmatpush2.bf16.msra.mxu0 0
      %341 = vmatprep.subr.bf16.mxu0 0
      %342 = vmatpush2.bf16.msra.mxu0 0
      %343 = vmatprep.subr.bf16.mxu0 0
      %344 = vmatpush2.bf16.msra.mxu0 0
      %345 = vmatprep.subr.bf16.mxu0 0
      %346 = vmatpush2.bf16.msra.mxu0 0
      %347 = vmatprep.subr.bf16.mxu0 0
      %348 = vmatpush2.bf16.msra.mxu0 0
      %349 = vmatprep.mubr.bf16.mxu0 0
      %350 = vmatmul.mubr.bf16.gmra.mxu0 %v270
      %v351 = vpop.f32.mrf.mxu0
      %v352 = vadd.f32 0.0, %v351
      %v353 = vpop.f32.mrf.mxu0
      %v354 = vpop.f32.mrf.mxu0
      %v355 = vadd.f32 0.0, %v354
      %v356 = vpop.f32.mrf.mxu0
      %357 = vmatprep.mubr.bf16.mxu0 0
      %358 = vmatmul.mubr.bf16.gmra.mxu0 %v273
      %v359 = vpop.f32.mrf.mxu0
      %v360 = vadd.f32 0.0, %v359
      %v361 = vpop.f32.mrf.mxu0
      %v362 = vpop.f32.mrf.mxu0
      %v363 = vadd.f32 0.0, %v362
      %v364 = vpop.f32.mrf.mxu0
      %365 = vmatprep.mubr.bf16.mxu0 0
      %366 = vmatmul.mubr.bf16.gmra.mxu0 %v276
      %v367 = vpop.f32.mrf.mxu0
      %v368 = vadd.f32 0.0, %v367
      %v369 = vpop.f32.mrf.mxu0
      %v370 = vpop.f32.mrf.mxu0
      %v371 = vadd.f32 0.0, %v370
      %v372 = vpop.f32.mrf.mxu0
      %373 = vmatprep.mubr.bf16.mxu0 0
      %374 = vmatmul.mubr.bf16.gmra.mxu0 %v279
      %v375 = vpop.f32.mrf.mxu0
      %v376 = vadd.f32 0.0, %v375
      %v377 = vpop.f32.mrf.mxu0
      %v378 = vpop.f32.mrf.mxu0
      %v379 = vadd.f32 0.0, %v378
      %v380 = vpop.f32.mrf.mxu0
      %381 = vmatprep.mubr.bf16.mxu0 0
      %382 = vmatmul.mubr.bf16.gmra.mxu0 %v282
      %v383 = vpop.f32.mrf.mxu0
      %v384 = vadd.f32 0.0, %v383
      %v385 = vpop.f32.mrf.mxu0
      %v386 = vpop.f32.mrf.mxu0
      %v387 = vadd.f32 0.0, %v386
      %v388 = vpop.f32.mrf.mxu0
      %389 = vmatprep.mubr.bf16.mxu0 0
      %390 = vmatmul.mubr.bf16.gmra.mxu0 %v285
      %v391 = vpop.f32.mrf.mxu0
      %v392 = vadd.f32 0.0, %v391
      %v393 = vpop.f32.mrf.mxu0
      %v394 = vpop.f32.mrf.mxu0
      %v395 = vadd.f32 0.0, %v394
      %v396 = vpop.f32.mrf.mxu0
      %397 = vmatprep.mubr.bf16.mxu0 0
      %398 = vmatmul.mubr.bf16.gmra.mxu0 %v288
      %v399 = vpop.f32.mrf.mxu0
      %v400 = vadd.f32 0.0, %v399
      %v401 = vpop.f32.mrf.mxu0
      %v402 = vpop.f32.mrf.mxu0
      %v403 = vadd.f32 0.0, %v402
      %v404 = vpop.f32.mrf.mxu0
      %405 = vmatprep.mubr.bf16.mxu0 0
      %406 = vmatmul.mubr.bf16.gmra.mxu0 %v291
      %v407 = vpop.f32.mrf.mxu0
      %v408 = vadd.f32 0.0, %v407
      %v409 = vpop.f32.mrf.mxu0
      %v410 = vpop.f32.mrf.mxu0
      %v411 = vadd.f32 0.0, %v410
      %v412 = vpop.f32.mrf.mxu0
      %413 = vmatprep.mubr.bf16.mxu0 0
      %414 = vmatmul.mubr.bf16.gmra.mxu0 %v294
      %v415 = vpop.f32.mrf.mxu0
      %v416 = vadd.f32 0.0, %v415
      %v417 = vpop.f32.mrf.mxu0
      %v418 = vpop.f32.mrf.mxu0
      %v419 = vadd.f32 0.0, %v418
      %v420 = vpop.f32.mrf.mxu0
      %421 = vmatprep.mubr.bf16.mxu0 0
      %422 = vmatmul.mubr.bf16.gmra.mxu0 %v297
      %v423 = vpop.f32.mrf.mxu0
      %v424 = vadd.f32 0.0, %v423
      %v425 = vpop.f32.mrf.mxu0
      %v426 = vpop.f32.mrf.mxu0
      %v427 = vadd.f32 0.0, %v426
      %v428 = vpop.f32.mrf.mxu0
      %429 = vmatprep.mubr.bf16.mxu0 0
      %430 = vmatmul.mubr.bf16.gmra.mxu0 %v300
      %v431 = vpop.f32.mrf.mxu0
      %v432 = vadd.f32 0.0, %v431
      %v433 = vpop.f32.mrf.mxu0
      %v434 = vpop.f32.mrf.mxu0
      %v435 = vadd.f32 0.0, %v434
      %v436 = vpop.f32.mrf.mxu0
      %437 = vmatprep.mubr.bf16.mxu0 0
      %438 = vmatmul.mubr.bf16.gmra.mxu0 %v303
      %v439 = vpop.f32.mrf.mxu0
      %v440 = vadd.f32 0.0, %v439
      %v441 = vpop.f32.mrf.mxu0
      %v442 = vpop.f32.mrf.mxu0
      %v443 = vadd.f32 0.0, %v442
      %v444 = vpop.f32.mrf.mxu0
      %445 = vmatprep.mubr.bf16.mxu0 0
      %446 = vmatmul.mubr.bf16.gmra.mxu0 %v306
      %v447 = vpop.f32.mrf.mxu0
      %v448 = vadd.f32 0.0, %v447
      %v449 = vpop.f32.mrf.mxu0
      %v450 = vpop.f32.mrf.mxu0
      %v451 = vadd.f32 0.0, %v450
      %v452 = vpop.f32.mrf.mxu0
      %453 = vmatprep.mubr.bf16.mxu0 0
      %454 = vmatmul.mubr.bf16.gmra.mxu0 %v309
      %v455 = vpop.f32.mrf.mxu0
      %v456 = vadd.f32 0.0, %v455
      %v457 = vpop.f32.mrf.mxu0
      %v458 = vpop.f32.mrf.mxu0
      %v459 = vadd.f32 0.0, %v458
      %v460 = vpop.f32.mrf.mxu0
      %461 = vmatprep.mubr.bf16.mxu0 0
      %462 = vmatmul.mubr.bf16.gmra.mxu0 %v312
      %v463 = vpop.f32.mrf.mxu0
      %v464 = vadd.f32 0.0, %v463
      %v465 = vpop.f32.mrf.mxu0
      %v466 = vpop.f32.mrf.mxu0
      %v467 = vadd.f32 0.0, %v466
      %v468 = vpop.f32.mrf.mxu0
      %469 = vmatprep.mubr.bf16.mxu0 0
      %470 = vmatmul.mubr.bf16.gmra.mxu0 %v315
      %v471 = vpop.f32.mrf.mxu0
      %v472 = vadd.f32 0.0, %v471
      %v473 = vpop.f32.mrf.mxu0
      %v474 = vpop.f32.mrf.mxu0
      %v475 = vadd.f32 0.0, %v474
      %v476 = vpop.f32.mrf.mxu0
      %477 = vdwg.mxu0
      %v478 = vpack.c.bf16 %v355, %v352
      %v479 = vpack.c.bf16 %v363, %v360
      %v480 = vpack.c.bf16 %v371, %v368
      %v481 = vpack.c.bf16 %v379, %v376
      %v482 = vpack.c.bf16 %v387, %v384
      %v483 = vpack.c.bf16 %v395, %v392
      %v484 = vpack.c.bf16 %v403, %v400
      %v485 = vpack.c.bf16 %v411, %v408
      %v486 = vpack.c.bf16 %v419, %v416
      %v487 = vpack.c.bf16 %v427, %v424
      %v488 = vpack.c.bf16 %v435, %v432
      %v489 = vpack.c.bf16 %v443, %v440
      %v490 = vpack.c.bf16 %v451, %v448
      %v491 = vpack.c.bf16 %v459, %v456
      %v492 = vpack.c.bf16 %v467, %v464
      %v493 = vpack.c.bf16 %v475, %v472
      %v510 = vunpack.c.l.b16 %v478
      %v511 = vunpack.c.h.b16 %v478
      %v512 = vunpack.c.l.b16 %v479
      %v513 = vunpack.c.h.b16 %v479
      %v514 = vunpack.c.l.b16 %v480
      %v515 = vunpack.c.h.b16 %v480
      %v516 = vunpack.c.l.b16 %v481
      %v517 = vunpack.c.h.b16 %v481
      %v518 = vunpack.c.l.b16 %v482
      %v519 = vunpack.c.h.b16 %v482
      %v520 = vunpack.c.l.b16 %v483
      %v521 = vunpack.c.h.b16 %v483
      %v522 = vunpack.c.l.b16 %v484
      %v523 = vunpack.c.h.b16 %v484
      %v524 = vunpack.c.l.b16 %v485
      %v525 = vunpack.c.h.b16 %v485
      %v526 = vunpack.c.l.b16 %v486
      %v527 = vunpack.c.h.b16 %v486
      %v528 = vunpack.c.l.b16 %v487
      %v529 = vunpack.c.h.b16 %v487
      %v530 = vunpack.c.l.b16 %v488
      %v531 = vunpack.c.h.b16 %v488
      %v532 = vunpack.c.l.b16 %v489
      %v533 = vunpack.c.h.b16 %v489
      %v534 = vunpack.c.l.b16 %v490
      %v535 = vunpack.c.h.b16 %v490
      %v536 = vunpack.c.l.b16 %v491
      %v537 = vunpack.c.h.b16 %v491
      %v538 = vunpack.c.l.b16 %v492
      %v539 = vunpack.c.h.b16 %v492
      %v540 = vunpack.c.l.b16 %v493
      %v541 = vunpack.c.h.b16 %v493
      %v542 = vpack.c.b16 %v510, %v510
      %v543 = vpack.c.b16 %v511, %v511
      %v544 = vpack.c.b16 %v512, %v512
      %v545 = vpack.c.b16 %v513, %v513
      %v546 = vpack.c.b16 %v514, %v514
      %v547 = vpack.c.b16 %v515, %v515
      %v548 = vpack.c.b16 %v516, %v516
      %v549 = vpack.c.b16 %v517, %v517
      %v550 = vpack.c.b16 %v518, %v518
      %v551 = vpack.c.b16 %v519, %v519
      %v552 = vpack.c.b16 %v520, %v520
      %v553 = vpack.c.b16 %v521, %v521
      %v554 = vpack.c.b16 %v522, %v522
      %v555 = vpack.c.b16 %v523, %v523
      %v556 = vpack.c.b16 %v524, %v524
      %v557 = vpack.c.b16 %v525, %v525
      %v558 = vpack.c.b16 %v526, %v526
      %v559 = vpack.c.b16 %v527, %v527
      %v560 = vpack.c.b16 %v528, %v528
      %v561 = vpack.c.b16 %v529, %v529
      %v562 = vpack.c.b16 %v530, %v530
      %v563 = vpack.c.b16 %v531, %v531
      %v564 = vpack.c.b16 %v532, %v532
      %v565 = vpack.c.b16 %v533, %v533
      %v566 = vpack.c.b16 %v534, %v534
      %v567 = vpack.c.b16 %v535, %v535
      %v568 = vpack.c.b16 %v536, %v536
      %v569 = vpack.c.b16 %v537, %v537
      %v570 = vpack.c.b16 %v538, %v538
      %v571 = vpack.c.b16 %v539, %v539
      %v572 = vpack.c.b16 %v540, %v540
      %v573 = vpack.c.b16 %v541, %v541
      %606 = vst [vmem:[%s201] sm:$0xf] %v542
      %607 = vst [vmem:[%s201 + $0x4] sm:$0xf] %v543
      %608 = vst [vmem:[%s201 + $0x8] sm:$0xf] %v544
      %609 = vst [vmem:[%s201 + $0xc] sm:$0xf] %v545
      %610 = vst [vmem:[%s201 + $0x10] sm:$0xf] %v546
      %611 = vst [vmem:[%s201 + $0x14] sm:$0xf] %v547
      %612 = vst [vmem:[%s201 + $0x18] sm:$0xf] %v548
      %613 = vst [vmem:[%s201 + $0x1c] sm:$0xf] %v549
      %614 = vst [vmem:[%s201 + $0x20] sm:$0xf] %v550
      %615 = vst [vmem:[%s201 + $0x24] sm:$0xf] %v551
      %616 = vst [vmem:[%s201 + $0x28] sm:$0xf] %v552
      %617 = vst [vmem:[%s201 + $0x2c] sm:$0xf] %v553
      %618 = vst [vmem:[%s201 + $0x30] sm:$0xf] %v554
      %619 = vst [vmem:[%s201 + $0x34] sm:$0xf] %v555
      %620 = vst [vmem:[%s201 + $0x38] sm:$0xf] %v556
      %621 = vst [vmem:[%s201 + $0x3c] sm:$0xf] %v557
      %622 = vst [vmem:[%s201 + $0x40] sm:$0xf] %v558
      %623 = vst [vmem:[%s201 + $0x44] sm:$0xf] %v559
      %624 = vst [vmem:[%s201 + $0x48] sm:$0xf] %v560
      %625 = vst [vmem:[%s201 + $0x4c] sm:$0xf] %v561
      %626 = vst [vmem:[%s201 + $0x50] sm:$0xf] %v562
      %627 = vst [vmem:[%s201 + $0x54] sm:$0xf] %v563
      %628 = vst [vmem:[%s201 + $0x58] sm:$0xf] %v564
      %629 = vst [vmem:[%s201 + $0x5c] sm:$0xf] %v565
      %630 = vst [vmem:[%s201 + $0x60] sm:$0xf] %v566
      %631 = vst [vmem:[%s201 + $0x64] sm:$0xf] %v567
      %632 = vst [vmem:[%s201 + $0x68] sm:$0xf] %v568
      %633 = vst [vmem:[%s201 + $0x6c] sm:$0xf] %v569
      %634 = vst [vmem:[%s201 + $0x70] sm:$0xf] %v570
      %635 = vst [vmem:[%s201 + $0x74] sm:$0xf] %v571
      %636 = vst [vmem:[%s201 + $0x78] sm:$0xf] %v572
      %637 = vst [vmem:[%s201 + $0x7c] sm:$0xf] %v573
      %s638 = smul.u32 32, %s18
      %p639 = scmp.lt.s32.totalorder %s17, 3
      %s640 = scalar_select %p639, %s17, 3
      %p641 = scmp.lt.s32.totalorder %s638, 31
      %s642 = scalar_select %p641, %s638, 31
      %s643 = smul.addr %s640, 32
      %s644 = sadd.s32 %s642, %s643
      %s645 = smul.addr %s644, 4
      %s646 = scalar_lea.vmem %s2, %s645
      // Predicated region
      $region29: #{grcu_forward.4} parent=27 // pred_check
        %p647 = pneg %p99
      $region30: #{grcu_forward.4} parent=27 // pred_check_branch
        %649 = sbr.rel (%p647) target = $region32
      $region31: #{grcu_forward.4} parent=27 // pred_region
        %s650 = smul.u32 32, %s18
      $region32: #{grcu_forward.4} parent=27 // pred_fallthru
        _
    $region28: #{grcu_forward.4} parent=5 // pred_fallthru
      _
    %p651 = scmp.le.s32.totalorder 2, %s8
    // Predicated region
    $region33: #{grcu_forward.4} parent=5 // pred_check
      %p652 = pneg %p651
    $region34: #{grcu_forward.4} parent=5 // pred_check_branch
      %654 = sbr.rel (%p652) target = $region36
    $region35: #{grcu_forward.4} parent=5 // pred_region
      %s655 = ssub.s32 %s8, 2
      // Predicated region
      $region37: #{grcu_forward.4} parent=35 // pred_check
        %p656 = pneg %p105
      $region38: #{grcu_forward.4} parent=35 // pred_check_branch
        %658 = sbr.rel (%p656) target = $region40
      $region39: #{grcu_forward.4} parent=35 // pred_region
        %s659 = smul.u32 32, %s20
        %p660 = scmp.lt.s32.totalorder %s19, 3
        %s661 = scalar_select %p660, %s19, 3
        %p662 = scmp.lt.s32.totalorder %s659, 31
        %s663 = scalar_select %p662, %s659, 31
        %s664 = smul.addr %s661, 32
        %s665 = sadd.s32 %s663, %s664
        %s666 = smul.addr %s665, 4
        %s667 = scalar_lea.vmem %s2, %s666
      $region40: #{grcu_forward.4} parent=35 // pred_fallthru
        _
    $region36: #{grcu_forward.4} parent=5 // pred_fallthru
      _
  $region6: #{grcu_forward.4} parent=0 // loop_footer
    %s12 = sadd.s32 1, %s8
  $region7: #{grcu_forward.4} parent=0 // loop_footer_branch
    %7 = sbr.rel target = $region3
  $region8: #{grcu_forward.4} parent=0 // loop_exit
    _

// kernel: grcu_forward.3
$region0: #{grcu_forward.3}
  #allocation0 [shape = 'u32[]', space=smem, size = 0x4, offset = 0x4, fixed_abs, tag = 'smem constant byte address 0x4 - core index']
  #allocation1 [shape = 'u32[144,128]{1,0:T(1,128)}', space=vmem, size = 0x12000, scoped, tag = 'internal scratch']
  #allocation2 [shape = 'f32[32,128]{1,0:T(8,128)}', space=vmem, size = 0x4000, scoped, tag = 'scratch operand']
  %s0 = inlined_call_operand.vmem [shape: f32[96,32], index: 0, kind: input, shape index: {}]
  %s1 = inlined_call_operand.vmem [shape: f32[96,128], index: 1, kind: input, shape index: {}]
  %s2 = inlined_call_operand.vmem [shape: f32[32,32], index: 2, kind: input, shape index: {}]
  %s3 = inlined_call_operand.vmem [shape: f32[32,128], index: 3, kind: input, shape index: {}]
  %s4 = inlined_call_operand.vmem [shape: bf16[4,32,128], index: 4, kind: output, shape index: {}]
  %s5 = sld [smem:[#allocation0]]
  $region37: #{grcu_forward.3} parent=0
    _
  %s7 = ssub.s32 1, %s5
  %s8 = scalar_select 0, %s7, %s5
  // Predicated region
  $region2: #{grcu_forward.3} parent=0 // pred_check
    _
  $region3: #{grcu_forward.3} parent=0 // pred_check_branch
    %10 = sbr.rel (0) target = $region5
  $region4: #{grcu_forward.3} parent=0 // pred_region
    _
  $region5: #{grcu_forward.3} parent=0 // pred_fallthru
    _
  // Predicated region
  $region6: #{grcu_forward.3} parent=0 // pred_check
    _
  $region7: #{grcu_forward.3} parent=0 // pred_check_branch
    %12 = sbr.rel (0) target = $region9
  $region8: #{grcu_forward.3} parent=0 // pred_region
    _
  $region9: #{grcu_forward.3} parent=0 // pred_fallthru
    _
  // Predicated region
  $region10: #{grcu_forward.3} parent=0 // pred_check
    _
  $region11: #{grcu_forward.3} parent=0 // pred_check_branch
    %14 = sbr.rel (0) target = $region13
  $region12: #{grcu_forward.3} parent=0 // pred_region
    _
  $region13: #{grcu_forward.3} parent=0 // pred_fallthru
    _
  // Predicated region
  $region14: #{grcu_forward.3} parent=0 // pred_check
    _
  $region15: #{grcu_forward.3} parent=0 // pred_check_branch
    %16 = sbr.rel (0) target = $region17
  $region16: #{grcu_forward.3} parent=0 // pred_region
    _
  $region17: #{grcu_forward.3} parent=0 // pred_fallthru
    _
  %p17 = scmp.eq.s32.totalorder 0, 0
  // Predicated region
  $region18: #{grcu_forward.3} parent=0 // pred_check
    %p18 = pneg %p17
  $region19: #{grcu_forward.3} parent=0 // pred_check_branch
    %20 = sbr.rel (%p18) target = $region21
  $region20: #{grcu_forward.3} parent=0 // pred_region
    %v21 = vld [vmem:[%s3] sm:$0xff]
    %v22 = vld [vmem:[%s3 + $0x8] sm:$0xff]
    %v23 = vld [vmem:[%s3 + $0x10] sm:$0xff]
    %v24 = vld [vmem:[%s3 + $0x18] sm:$0xff]
    %25 = vst [vmem:[#allocation2] sm:$0xff] %v21
    %26 = vst [vmem:[#allocation2 + $0x8] sm:$0xff] %v22
    %27 = vst [vmem:[#allocation2 + $0x10] sm:$0xff] %v23
    %28 = vst [vmem:[#allocation2 + $0x18] sm:$0xff] %v24
  $region21: #{grcu_forward.3} parent=0 // pred_fallthru
    _
  %v29 = vld [vmem:[%s0] sm:$0xff]
  %v30 = vld [vmem:[%s0 + $0x8] sm:$0xff]
  %v31 = vld [vmem:[%s0 + $0x10] sm:$0xff]
  %v32 = vld [vmem:[%s0 + $0x18] sm:$0xff]
  %v33 = vld [vmem:[%s0 + $0x20] sm:$0xff]
  %v34 = vld [vmem:[%s0 + $0x28] sm:$0xff]
  %v35 = vld [vmem:[%s0 + $0x30] sm:$0xff]
  %v36 = vld [vmem:[%s0 + $0x38] sm:$0xff]
  %v37 = vld [vmem:[%s0 + $0x40] sm:$0xff]
  %v38 = vld [vmem:[%s0 + $0x48] sm:$0xff]
  %v39 = vld [vmem:[%s0 + $0x50] sm:$0xff]
  %v40 = vld [vmem:[%s0 + $0x58] sm:$0xff]
  %v41 = vld [vmem:[%s1] sm:$0xff]
  %v42 = vld [vmem:[%s1 + $0x8] sm:$0xff]
  %v43 = vld [vmem:[%s1 + $0x10] sm:$0xff]
  %v44 = vld [vmem:[%s1 + $0x18] sm:$0xff]
  %v45 = vld [vmem:[%s1 + $0x20] sm:$0xff]
  %v46 = vld [vmem:[%s1 + $0x28] sm:$0xff]
  %v47 = vld [vmem:[%s1 + $0x30] sm:$0xff]
  %v48 = vld [vmem:[%s1 + $0x38] sm:$0xff]
  %v49 = vld [vmem:[%s1 + $0x40] sm:$0xff]
  %v50 = vld [vmem:[%s1 + $0x48] sm:$0xff]
  %v51 = vld [vmem:[%s1 + $0x50] sm:$0xff]
  %v52 = vld [vmem:[%s1 + $0x58] sm:$0xff]
  %v53 = vld [vmem:[%s2] sm:$0xff]
  %v54 = vld [vmem:[%s2 + $0x8] sm:$0xff]
  %v55 = vld [vmem:[%s2 + $0x10] sm:$0xff]
  %v56 = vld [vmem:[%s2 + $0x18] sm:$0xff]
  loop: start=0, step=1, limit=4
  $region22: #{grcu_forward.3} parent=0 // loop_pre_header
    _
  $region23: #{grcu_forward.3} parent=0 // loop_header
    %s58 = sphi 0, %s62
    %p59 = scmp.ge.s32.totalorder %s58, 4
  $region24: #{grcu_forward.3} parent=0 // loop_header_branch
    %61 = sbr.rel (%p59) target = $region28
  $region25: #{grcu_forward.3} parent=0 // loop_body
    %v63 = vld [vmem:[#allocation2] sm:$0xff]
    %v64 = vld [vmem:[#allocation2 + $0x8] sm:$0xff]
    %v65 = vld [vmem:[#allocation2 + $0x10] sm:$0xff]
    %v66 = vld [vmem:[#allocation2 + $0x18] sm:$0xff]
    %vm67 = vcmask 261120
    %v69 = vsel %vm67, %v29, 0
    %v72 = vsel %vm67, %v30, 0
    %v75 = vsel %vm67, %v31, 0
    %v78 = vsel %vm67, %v32, 0
    %v81 = vsel %vm67, %v33, 0
    %v84 = vsel %vm67, %v34, 0
    %v87 = vsel %vm67, %v35, 0
    %v90 = vsel %vm67, %v36, 0
    %v93 = vsel %vm67, %v37, 0
    %v96 = vsel %vm67, %v38, 0
    %v99 = vsel %vm67, %v39, 0
    %v102 = vsel %vm67, %v40, 0
    %104 = vmatprep.subr.mxu0 0.0
    %105 = vmatpush1.msra.mxu0 0.0
    %106 = vmatprep.subr.mxu0 0.0
    %107 = vmatpush1.msra.mxu0 0.0
    %108 = vmatprep.subr.mxu0 0.0
    %109 = vmatpush1.msra.mxu0 0.0
    %110 = vmatprep.subr.mxu0 0.0
    %111 = vmatpush1.msra.mxu0 0.0
    %112 = vmatprep.subr.mxu0 0.0
    %113 = vmatpush1.msra.mxu0 0.0
    %114 = vmatprep.subr.mxu0 0.0
    %115 = vmatpush1.msra.mxu0 0.0
    %116 = vmatprep.subr.mxu0 0.0
    %117 = vmatpush1.msra.mxu0 0.0
    %118 = vmatprep.subr.mxu0 0.0
    %119 = vmatpush1.msra.mxu0 0.0
    %120 = vmatprep.subr.mxu0 0.0
    %121 = vmatpush1.msra.mxu0 0.0
    %122 = vmatprep.subr.mxu0 0.0
    %123 = vmatpush1.msra.mxu0 0.0
    %124 = vmatprep.subr.mxu0 0.0
    %125 = vmatpush1.msra.mxu0 0.0
    %126 = vmatprep.subr.mxu0 0.0
    %127 = vmatpush1.msra.mxu0 0.0
    %128 = vmatprep.subr.mxu0 0.0
    %129 = vmatpush1.msra.mxu0 %v66
    %130 = vmatprep.subr.mxu0 0.0
    %131 = vmatpush1.msra.mxu0 %v65
    %132 = vmatprep.subr.mxu0 0.0
    %133 = vmatpush1.msra.mxu0 %v64
    %134 = vmatprep.subr.mxu0 0.0
    %135 = vmatpush1.msra.mxu0 %v63
    %136 = vmatprep.subr.mxu0 0.0
    %137 = vmatpush2.msra.mxu0 0.0
    %138 = vmatprep.subr.mxu0 0.0
    %139 = vmatpush2.msra.mxu0 0.0
    %140 = vmatprep.subr.mxu0 0.0
    %141 = vmatpush2.msra.mxu0 0.0
    %142 = vmatprep.subr.mxu0 0.0
    %143 = vmatpush2.msra.mxu0 0.0
    %144 = vmatprep.subr.mxu0 0.0
    %145 = vmatpush2.msra.mxu0 0.0
    %146 = vmatprep.subr.mxu0 0.0
    %147 = vmatpush2.msra.mxu0 0.0
    %148 = vmatprep.subr.mxu0 0.0
    %149 = vmatpush2.msra.mxu0 0.0
    %150 = vmatprep.subr.mxu0 0.0
    %151 = vmatpush2.msra.mxu0 0.0
    %152 = vmatprep.subr.mxu0 0.0
    %153 = vmatpush2.msra.mxu0 0.0
    %154 = vmatprep.subr.mxu0 0.0
    %155 = vmatpush2.msra.mxu0 0.0
    %156 = vmatprep.subr.mxu0 0.0
    %157 = vmatpush2.msra.mxu0 0.0
    %158 = vmatprep.subr.mxu0 0.0
    %159 = vmatpush2.msra.mxu0 0.0
    %160 = vmatprep.subr.mxu0 0.0
    %161 = vmatpush2.msra.mxu0 0.0
    %162 = vmatprep.subr.mxu0 0.0
    %163 = vmatpush2.msra.mxu0 0.0
    %164 = vmatprep.subr.mxu0 0.0
    %165 = vmatpush2.msra.mxu0 0.0
    %166 = vmatprep.subr.mxu0 0.0
    %167 = vmatpush2.msra.mxu0 0.0
    %168 = vmatprep.mubr.f32.mxu0 0.0
    %169 = vmatmul.mubr.f32.gmra.mxu0 %v69
    %v170 = vpop.f32.mrf.mxu0
    %v171 = vadd.f32 %v41, %v170
    %v172 = vpop.f32.mrf.mxu0
    %173 = vmatprep.mubr.f32.mxu0 0.0
    %174 = vmatmul.mubr.f32.gmra.mxu0 %v72
    %v175 = vpop.f32.mrf.mxu0
    %v176 = vadd.f32 %v42, %v175
    %v177 = vpop.f32.mrf.mxu0
    %178 = vmatprep.mubr.f32.mxu0 0.0
    %179 = vmatmul.mubr.f32.gmra.mxu0 %v75
    %v180 = vpop.f32.mrf.mxu0
    %v181 = vadd.f32 %v43, %v180
    %v182 = vpop.f32.mrf.mxu0
    %183 = vmatprep.mubr.f32.mxu0 0.0
    %184 = vmatmul.mubr.f32.gmra.mxu0 %v78
    %v185 = vpop.f32.mrf.mxu0
    %v186 = vadd.f32 %v44, %v185
    %v187 = vpop.f32.mrf.mxu0
    %188 = vmatprep.mubr.f32.mxu0 0.0
    %189 = vmatmul.mubr.f32.gmra.mxu0 %v81
    %v190 = vpop.f32.mrf.mxu0
    %v191 = vadd.f32 %v45, %v190
    %v192 = vpop.f32.mrf.mxu0
    %193 = vmatprep.mubr.f32.mxu0 0.0
    %194 = vmatmul.mubr.f32.gmra.mxu0 %v84
    %v195 = vpop.f32.mrf.mxu0
    %v196 = vadd.f32 %v46, %v195
    %v197 = vpop.f32.mrf.mxu0
    %198 = vmatprep.mubr.f32.mxu0 0.0
    %199 = vmatmul.mubr.f32.gmra.mxu0 %v87
    %v200 = vpop.f32.mrf.mxu0
    %v201 = vadd.f32 %v47, %v200
    %v202 = vpop.f32.mrf.mxu0
    %203 = vmatprep.mubr.f32.mxu0 0.0
    %204 = vmatmul.mubr.f32.gmra.mxu0 %v90
    %v205 = vpop.f32.mrf.mxu0
    %v206 = vadd.f32 %v48, %v205
    %v207 = vpop.f32.mrf.mxu0
    %208 = vmatprep.mubr.f32.mxu0 0.0
    %209 = vmatmul.mubr.f32.gmra.mxu0 %v93
    %v210 = vpop.f32.mrf.mxu0
    %v211 = vadd.f32 %v49, %v210
    %v212 = vpop.f32.mrf.mxu0
    %213 = vmatprep.mubr.f32.mxu0 0.0
    %214 = vmatmul.mubr.f32.gmra.mxu0 %v96
    %v215 = vpop.f32.mrf.mxu0
    %v216 = vadd.f32 %v50, %v215
    %v217 = vpop.f32.mrf.mxu0
    %218 = vmatprep.mubr.f32.mxu0 0.0
    %219 = vmatmul.mubr.f32.gmra.mxu0 %v99
    %v220 = vpop.f32.mrf.mxu0
    %v221 = vadd.f32 %v51, %v220
    %v222 = vpop.f32.mrf.mxu0
    %223 = vmatprep.mubr.f32.mxu0 0.0
    %224 = vmatmul.mubr.f32.gmra.mxu0 %v102
    %v225 = vpop.f32.mrf.mxu0
    %v226 = vadd.f32 %v52, %v225
    %v227 = vpop.f32.mrf.mxu0
    %228 = vdwg.mxu0
    %v229 = vxor.u32 %v171, 2147483648
    %v230 = vxor.u32 %v176, 2147483648
    %v231 = vxor.u32 %v181, 2147483648
    %v232 = vxor.u32 %v186, 2147483648
    %v233 = vmul.f32 %v229, 1.442695
    %v234 = vpow.pop %v233
    %v235 = vmul.f32 %v230, 1.442695
    %v236 = vpow.pop %v235
    %v237 = vmul.f32 %v231, 1.442695
    %v238 = vpow.pop %v237
    %v239 = vmul.f32 %v232, 1.442695
    %v240 = vpow.pop %v239
    %v241 = vadd.f32 %v234, 1.0
    %v242 = vadd.f32 %v236, 1.0
    %v243 = vadd.f32 %v238, 1.0
    %v244 = vadd.f32 %v240, 1.0
    %v245 = vrcp.pop %v241
    %v246 = vmul.f32 1.0, %v245
    %v247 = vrcp.pop %v242
    %v248 = vmul.f32 1.0, %v247
    %v249 = vrcp.pop %v243
    %v250 = vmul.f32 1.0, %v249
    %v251 = vrcp.pop %v244
    %v252 = vmul.f32 1.0, %v251
    %v253 = vxor.u32 %v191, 2147483648
    %v254 = vxor.u32 %v196, 2147483648
    %v255 = vxor.u32 %v201, 2147483648
    %v256 = vxor.u32 %v206, 2147483648
    %v257 = vmul.f32 %v253, 1.442695
    %v258 = vpow.pop %v257
    %v259 = vmul.f32 %v254, 1.442695
    %v260 = vpow.pop %v259
    %v261 = vmul.f32 %v255, 1.442695
    %v262 = vpow.pop %v261
    %v263 = vmul.f32 %v256, 1.442695
    %v264 = vpow.pop %v263
    %v265 = vadd.f32 %v258, 1.0
    %v266 = vadd.f32 %v260, 1.0
    %v267 = vadd.f32 %v262, 1.0
    %v268 = vadd.f32 %v264, 1.0
    %v269 = vrcp.pop %v265
    %v270 = vmul.f32 1.0, %v269
    %v271 = vrcp.pop %v266
    %v272 = vmul.f32 1.0, %v271
    %v273 = vrcp.pop %v267
    %v274 = vmul.f32 1.0, %v273
    %v275 = vrcp.pop %v268
    %v276 = vmul.f32 1.0, %v275
    %v277 = vmul.f32 %v270, %v63
    %v278 = vmul.f32 %v272, %v64
    %v279 = vmul.f32 %v274, %v65
    %v280 = vmul.f32 %v276, %v66
    %v282 = vsel %vm67, %v53, 0
    %v285 = vsel %vm67, %v54, 0
    %v288 = vsel %vm67, %v55, 0
    %v291 = vsel %vm67, %v56, 0
    %293 = vmatprep.subr.mxu0 0.0
    %294 = vmatpush1.msra.mxu0 0.0
    %295 = vmatprep.subr.mxu0 0.0
    %296 = vmatpush1.msra.mxu0 0.0
    %297 = vmatprep.subr.mxu0 0.0
    %298 = vmatpush1.msra.mxu0 0.0
    %299 = vmatprep.subr.mxu0 0.0
    %300 = vmatpush1.msra.mxu0 0.0
    %301 = vmatprep.subr.mxu0 0.0
    %302 = vmatpush1.msra.mxu0 0.0
    %303 = vmatprep.subr.mxu0 0.0
    %304 = vmatpush1.msra.mxu0 0.0
    %305 = vmatprep.subr.mxu0 0.0
    %306 = vmatpush1.msra.mxu0 0.0
    %307 = vmatprep.subr.mxu0 0.0
    %308 = vmatpush1.msra.mxu0 0.0
    %309 = vmatprep.subr.mxu0 0.0
    %310 = vmatpush1.msra.mxu0 0.0
    %311 = vmatprep.subr.mxu0 0.0
    %312 = vmatpush1.msra.mxu0 0.0
    %313 = vmatprep.subr.mxu0 0.0
    %314 = vmatpush1.msra.mxu0 0.0
    %315 = vmatprep.subr.mxu0 0.0
    %316 = vmatpush1.msra.mxu0 0.0
    %317 = vmatprep.subr.mxu0 0.0
    %318 = vmatpush1.msra.mxu0 %v280
    %319 = vmatprep.subr.mxu0 0.0
    %320 = vmatpush1.msra.mxu0 %v279
    %321 = vmatprep.subr.mxu0 0.0
    %322 = vmatpush1.msra.mxu0 %v278
    %323 = vmatprep.subr.mxu0 0.0
    %324 = vmatpush1.msra.mxu0 %v277
    %325 = vmatprep.subr.mxu0 0.0
    %326 = vmatpush2.msra.mxu0 0.0
    %327 = vmatprep.subr.mxu0 0.0
    %328 = vmatpush2.msra.mxu0 0.0
    %329 = vmatprep.subr.mxu0 0.0
    %330 = vmatpush2.msra.mxu0 0.0
    %331 = vmatprep.subr.mxu0 0.0
    %332 = vmatpush2.msra.mxu0 0.0
    %333 = vmatprep.subr.mxu0 0.0
    %334 = vmatpush2.msra.mxu0 0.0
    %335 = vmatprep.subr.mxu0 0.0
    %336 = vmatpush2.msra.mxu0 0.0
    %337 = vmatprep.subr.mxu0 0.0
    %338 = vmatpush2.msra.mxu0 0.0
    %339 = vmatprep.subr.mxu0 0.0
    %340 = vmatpush2.msra.mxu0 0.0
    %341 = vmatprep.subr.mxu0 0.0
    %342 = vmatpush2.msra.mxu0 0.0
    %343 = vmatprep.subr.mxu0 0.0
    %344 = vmatpush2.msra.mxu0 0.0
    %345 = vmatprep.subr.mxu0 0.0
    %346 = vmatpush2.msra.mxu0 0.0
    %347 = vmatprep.subr.mxu0 0.0
    %348 = vmatpush2.msra.mxu0 0.0
    %349 = vmatprep.subr.mxu0 0.0
    %350 = vmatpush2.msra.mxu0 0.0
    %351 = vmatprep.subr.mxu0 0.0
    %352 = vmatpush2.msra.mxu0 0.0
    %353 = vmatprep.subr.mxu0 0.0
    %354 = vmatpush2.msra.mxu0 0.0
    %355 = vmatprep.subr.mxu0 0.0
    %356 = vmatpush2.msra.mxu0 0.0
    %357 = vmatprep.mubr.f32.mxu0 0.0
    %358 = vmatmul.mubr.f32.gmra.mxu0 %v282
    %v359 = vpop.f32.mrf.mxu0
    %v360 = vadd.f32 0.0, %v359
    %v361 = vpop.f32.mrf.mxu0
    %362 = vmatprep.mubr.f32.mxu0 0.0
    %363 = vmatmul.mubr.f32.gmra.mxu0 %v285
    %v364 = vpop.f32.mrf.mxu0
    %v365 = vadd.f32 0.0, %v364
    %v366 = vpop.f32.mrf.mxu0
    %367 = vmatprep.mubr.f32.mxu0 0.0
    %368 = vmatmul.mubr.f32.gmra.mxu0 %v288
    %v369 = vpop.f32.mrf.mxu0
    %v370 = vadd.f32 0.0, %v369
    %v371 = vpop.f32.mrf.mxu0
    %372 = vmatprep.mubr.f32.mxu0 0.0
    %373 = vmatmul.mubr.f32.gmra.mxu0 %v291
    %v374 = vpop.f32.mrf.mxu0
    %v375 = vadd.f32 0.0, %v374
    %v376 = vpop.f32.mrf.mxu0
    %377 = vdwg.mxu0
    %v378 = vadd.f32 %v211, %v360
    %v379 = vadd.f32 %v216, %v365
    %v380 = vadd.f32 %v221, %v370
    %v381 = vadd.f32 %v226, %v375
    %v382 = vtanh.pop %v378
    %v383 = vtanh.pop %v379
    %v384 = vtanh.pop %v380
    %v385 = vtanh.pop %v381
    %v386 = vsub.f32 1.0, %v246
    %v387 = vsub.f32 1.0, %v248
    %v388 = vsub.f32 1.0, %v250
    %v389 = vsub.f32 1.0, %v252
    %v390 = vmul.f32 %v386, %v63
    %v391 = vmul.f32 %v387, %v64
    %v392 = vmul.f32 %v388, %v65
    %v393 = vmul.f32 %v389, %v66
    %v394 = vmul.f32 %v246, %v382
    %v395 = vmul.f32 %v248, %v383
    %v396 = vmul.f32 %v250, %v384
    %v397 = vmul.f32 %v252, %v385
    %v398 = vadd.f32 %v390, %v394
    %v399 = vadd.f32 %v391, %v395
    %v400 = vadd.f32 %v392, %v396
    %v401 = vadd.f32 %v393, %v397
    %402 = vst [vmem:[#allocation2] sm:$0xff] %v398
    %403 = vst [vmem:[#allocation2 + $0x8] sm:$0xff] %v399
    %404 = vst [vmem:[#allocation2 + $0x10] sm:$0xff] %v400
    %405 = vst [vmem:[#allocation2 + $0x18] sm:$0xff] %v401
    %v406 = vpack.c.bf16 %v399, %v398
    %v407 = vpack.c.bf16 %v401, %v400
    %v410 = vunpack.c.l.b16 %v406
    %v411 = vunpack.c.h.b16 %v406
    %v412 = vunpack.c.l.b16 %v407
    %v413 = vunpack.c.h.b16 %v407
    %v414 = vpack.c.b16 %v410, %v410
    %v415 = vpack.c.b16 %v411, %v411
    %v416 = vpack.c.b16 %v412, %v412
    %v417 = vpack.c.b16 %v413, %v413
    %s422 = smul.u32 %s58, 4
    %s423 = smul.addr %s422, 4
    %s424 = scalar_lea.vmem %s4, %s423
    %425 = vst [vmem:[%s424] sm:$0xf] %v414
    %426 = vst [vmem:[%s424 + $0x4] sm:$0xf] %v415
    %427 = vst [vmem:[%s424 + $0x8] sm:$0xf] %v416
    %428 = vst [vmem:[%s424 + $0xc] sm:$0xf] %v417
  $region26: #{grcu_forward.3} parent=0 // loop_footer
    %s62 = sadd.s32 1, %s58
  $region27: #{grcu_forward.3} parent=0 // loop_footer_branch
    %57 = sbr.rel target = $region23
  $region28: #{grcu_forward.3} parent=0 // loop_exit
    _
  // Predicated region
  $region29: #{grcu_forward.3} parent=0 // pred_check
    _
  $region30: #{grcu_forward.3} parent=0 // pred_check_branch
    %430 = sbr.rel (0) target = $region32
  $region31: #{grcu_forward.3} parent=0 // pred_region
    _
  $region32: #{grcu_forward.3} parent=0 // pred_fallthru
    _
  // Predicated region
  $region33: #{grcu_forward.3} parent=0 // pred_check
    _
  $region34: #{grcu_forward.3} parent=0 // pred_check_branch
    %432 = sbr.rel (0) target = $region36
  $region35: #{grcu_forward.3} parent=0 // pred_region
    _
  $region36: #{grcu_forward.3} parent=0 // pred_fallthru
    _

// kernel: grcu_forward.5
$region0: #{grcu_forward.5}
  #allocation0 [shape = 'u32[]', space=smem, size = 0x4, offset = 0x4, fixed_abs, tag = 'smem constant byte address 0x4 - core index']
  #allocation1 [shape = 'u32[144,128]{1,0:T(1,128)}', space=vmem, size = 0x12000, scoped, tag = 'internal scratch']
  %s0 = inlined_call_operand.vmem [shape: f32[4,256,256], index: 0, kind: input, shape index: {}]
  %s1 = inlined_call_operand.vmem [shape: bf16[4,256,128], index: 1, kind: input, shape index: {}]
  %s2 = inlined_call_operand.hbm [shape: f32[4,256,128], index: 2, kind: output, shape index: {}]
  %s3 = sld [smem:[#allocation0]]
  $region41: #{grcu_forward.5} parent=0
    _
  %s5 = ssub.s32 1, %s3
  %s6 = scalar_select 0, %s5, %s3
  $region1: #{grcu_forward.5} parent=0
    #allocation2 [shape = 'u8[262144]{0}', space=vmem, size = 0x40000, scoped, tag = 'output window, operand 0']
    #allocation3 [shape = 's32[2]{0}', space=sflag, size = 0x8, scoped, tag = 'scoped memory for grcu_forward.5']
    %7 = vsyncpa [#allocation3], 0
    %s8 = scalar_lea.sflag [#allocation3], 1
    %9 = vsyncpa %s8, 0
    loop: start=0, step=1, limit=6
    $region2: #{grcu_forward.5} parent=1 // loop_pre_header
      _
    $region3: #{grcu_forward.5} parent=1 // loop_header
      %s11 = sphi 0, %s15
      %p12 = scmp.ge.s32.totalorder %s11, 6
      %s18 = sphi 0, %s30
      %s19 = sphi 0, %s26
      %s20 = sphi 0, %s18
      %s21 = sphi 0, %s19
      %s22 = sphi 0, %s20
      %s23 = sphi 0, %s21
      %s35 = sphi 0, %s37
      %s38 = sphi 0, %s35
      %s39 = sphi 0, %s38
      %s55 = sphi 0, %s39
      %s61 = sphi 0, %s63
      %s64 = sphi 0, %s61
      %s65 = sphi 0, %s64
      %s81 = sphi 0, %s65
      %s89 = sphi 0, %s91
      %s92 = sphi 0, %s89
      %s93 = sphi 0, %s92
      %s109 = sphi 0, %s93
    $region4: #{grcu_forward.5} parent=1 // loop_header_branch
      %14 = sbr.rel (%p12) target = $region8
    $region5: #{grcu_forward.5} parent=1 // loop_body
      %s16 = ssub.s32 %s11, 1
      %s17 = ssub.s32 %s11, 2
      %s24 = sadd.s32 1, %s19
      %p25 = scmp.ge.s32.totalorder %s24, 1
      %s26 = scalar_select %p25, 0, %s24
      %s27 = sadd.s32 1, %s18
      %s28 = scalar_select %p25, %s27, %s18
      %p29 = scmp.ge.s32.totalorder %s28, 4
      %s30 = scalar_select %p29, 0, %s28
      %s31 = ssub.s32 %s18, %s30
      %s32 = ssub.s32 %s19, %s26
      %s33 = sor.u32 %s31, %s32
      %p34 = scmp.eq.s32.totalorder %s33, 0
      %s36 = sadd.s32 %s35, 1
      %s37 = scalar_select %p34, %s35, %s36
      %p40 = pneg %p34
      %p41 = scmp.eq.s32.totalorder %s11, 3
      %p42 = por %p40, %p41
      %p43 = scmp.ne.s32.totalorder %s35, %s38
      %p44 = scmp.eq.s32.totalorder %s11, 0
      %p45 = por %p43, %p44
      %p46 = scmp.ne.s32.totalorder %s35, %s38
      %p47 = scmp.eq.s32.totalorder %s16, 3
      %p48 = por %p46, %p47
      %p49 = scmp.ne.s32.totalorder %s38, %s39
      %p50 = scmp.eq.s32.totalorder %s16, 0
      %p51 = por %p49, %p50
      %p52 = scmp.ne.s32.totalorder %s38, %s39
      %p53 = scmp.eq.s32.totalorder %s17, 3
      %p54 = por %p52, %p53
      %p56 = scmp.ne.s32.totalorder %s39, %s55
      %p57 = scmp.eq.s32.totalorder %s17, 0
      %p58 = por %p56, %p57
      %s59 = ssub.s32 %s18, %s30
      %p60 = scmp.eq.s32.totalorder %s59, 0
      %s62 = sadd.s32 %s61, 1
      %s63 = scalar_select %p60, %s61, %s62
      %p66 = pneg %p60
      %p67 = scmp.eq.s32.totalorder %s11, 3
      %p68 = por %p66, %p67
      %p69 = scmp.ne.s32.totalorder %s61, %s64
      %p70 = scmp.eq.s32.totalorder %s11, 0
      %p71 = por %p69, %p70
      %p72 = scmp.ne.s32.totalorder %s61, %s64
      %p73 = scmp.eq.s32.totalorder %s16, 3
      %p74 = por %p72, %p73
      %p75 = scmp.ne.s32.totalorder %s64, %s65
      %p76 = scmp.eq.s32.totalorder %s16, 0
      %p77 = por %p75, %p76
      %p78 = scmp.ne.s32.totalorder %s64, %s65
      %p79 = scmp.eq.s32.totalorder %s17, 3
      %p80 = por %p78, %p79
      %p82 = scmp.ne.s32.totalorder %s65, %s81
      %p83 = scmp.eq.s32.totalorder %s17, 0
      %p84 = por %p82, %p83
      %s85 = ssub.s32 %s18, %s30
      %s86 = ssub.s32 %s19, %s26
      %s87 = sor.u32 %s85, %s86
      %p88 = scmp.eq.s32.totalorder %s87, 0
      %s90 = sadd.s32 %s89, 1
      %s91 = scalar_select %p88, %s89, %s90
      %p94 = pneg %p88
      %p95 = scmp.eq.s32.totalorder %s11, 3
      %p96 = por %p94, %p95
      %p97 = scmp.ne.s32.totalorder %s89, %s92
      %p98 = scmp.eq.s32.totalorder %s11, 0
      %p99 = por %p97, %p98
      %p100 = scmp.ne.s32.totalorder %s89, %s92
      %p101 = scmp.eq.s32.totalorder %s16, 3
      %p102 = por %p100, %p101
      %p103 = scmp.ne.s32.totalorder %s92, %s93
      %p104 = scmp.eq.s32.totalorder %s16, 0
      %p105 = por %p103, %p104
      %p106 = scmp.ne.s32.totalorder %s92, %s93
      %p107 = scmp.eq.s32.totalorder %s17, 3
      %p108 = por %p106, %p107
      %p110 = scmp.ne.s32.totalorder %s93, %s109
      %p111 = scmp.eq.s32.totalorder %s17, 0
      %p112 = por %p110, %p111
      %p113 = scmp.le.s32.totalorder 1, %s11
      %p114 = scmp.lt.s32.totalorder %s11, 5
      %p115 = pnand %p113, %p114
      %p116 = pneg %p115
      // Predicated region
      $region9: #{grcu_forward.5} parent=5 // pred_check
        _
      $region10: #{grcu_forward.5} parent=5 // pred_check_branch
        %118 = sbr.rel (%p115) target = $region12
      $region11: #{grcu_forward.5} parent=5 // pred_region
        %s119 = ssub.s32 %s11, 1
      $region12: #{grcu_forward.5} parent=5 // pred_fallthru
        _
      %p120 = scmp.lt.s32.totalorder %s11, 4
      // Predicated region
      $region13: #{grcu_forward.5} parent=5 // pred_check
        %p121 = pneg %p120
      $region14: #{grcu_forward.5} parent=5 // pred_check_branch
        %123 = sbr.rel (%p121) target = $region16
      $region15: #{grcu_forward.5} parent=5 // pred_region
        // Predicated region
        $region17: #{grcu_forward.5} parent=15 // pred_check
          %p124 = pneg %p45
        $region18: #{grcu_forward.5} parent=15 // pred_check_branch
          %126 = sbr.rel (%p124) target = $region20
        $region19: #{grcu_forward.5} parent=15 // pred_region
          %s127 = smul.u32 32, %s19
          %p128 = scmp.lt.s32.totalorder %s18, 3
          %s129 = scalar_select %p128, %s18, 3
          %p130 = scmp.lt.s32.totalorder %s127, 31
          %s131 = scalar_select %p130, %s127, 31
          %s132 = smul.addr %s131, 2
          %s133 = smul.addr %s129, 64
          %s134 = sadd.s32 %s132, %s133
          %s135 = smul.addr %s134, 8
          %s136 = scalar_lea.vmem %s0, %s135
          %s137 = smul.u32 32, %s19
        $region20: #{grcu_forward.5} parent=15 // pred_fallthru
          _
        // Predicated region
        $region21: #{grcu_forward.5} parent=15 // pred_check
          %p138 = pneg %p71
        $region22: #{grcu_forward.5} parent=15 // pred_check_branch
          %140 = sbr.rel (%p138) target = $region24
        $region23: #{grcu_forward.5} parent=15 // pred_region
          %p141 = scmp.lt.s32.totalorder %s18, 3
          %s142 = scalar_select %p141, %s18, 3
          %s143 = smul.addr %s142, 32
          %s144 = smul.addr %s143, 4
          %s145 = scalar_lea.vmem %s1, %s144
        $region24: #{grcu_forward.5} parent=15 // pred_fallthru
          _
      $region16: #{grcu_forward.5} parent=5 // pred_fallthru
        _
      %p146 = scmp.le.s32.totalorder 1, %s11
      %p147 = scmp.lt.s32.totalorder %s11, 5
      %p148 = pnand %p146, %p147
      %p149 = pneg %p148
      // Predicated region
      $region25: #{grcu_forward.5} parent=5 // pred_check
        _
      $region26: #{grcu_forward.5} parent=5 // pred_check_branch
        %151 = sbr.rel (%p148) target = $region28
      $region27: #{grcu_forward.5} parent=5 // pred_region
        %s152 = ssub.s32 %s11, 1
        %s153 = smul.u32 32, %s21
        %p154 = scmp.lt.s32.totalorder %s20, 3
        %s155 = scalar_select %p154, %s20, 3
        %p156 = scmp.lt.s32.totalorder %s153, 31
        %s157 = scalar_select %p156, %s153, 31
        %s158 = smul.addr %s157, 2
        %s159 = smul.addr %s155, 64
        %s160 = sadd.s32 %s158, %s159
        %s161 = smul.addr %s160, 8
        %s162 = scalar_lea.vmem %s0, %s161
        %p163 = pneg %p51
        %p164 = pneg %p48
        %p165 = scmp.lt.s32.totalorder %s20, 3
        %s166 = scalar_select %p165, %s20, 3
        %s167 = smul.addr %s166, 32
        %s168 = smul.addr %s167, 4
        %s169 = scalar_lea.vmem %s1, %s168
        %p170 = pneg %p77
        %p171 = pneg %p74
        %p172 = pneg %p105
        %p173 = pneg %p102
        %s174 = sand.u32 %s92, 1
        %s175 = scalar_lea.sflag [#allocation3], %s174
        %s176 = sand.u32 %s92, 1
        %s177 = smul.addr %s176, 256
        %s178 = scalar_lea.vmem [#allocation2], %s177
        %s179 = smul.u32 32, %s21
        %p180 = scmp.lt.s32.totalorder %s20, 3
        %s181 = scalar_select %p180, %s20, 3
        %p182 = scmp.lt.s32.totalorder %s179, 31
        %s183 = scalar_select %p182, %s179, 31
        %s184 = smul.addr %s183, 2
        %s185 = smul.addr %s181, 64
        %s186 = sadd.s32 %s184, %s185
        %s187 = smul.addr %s186, 8
        %s188 = scalar_lea.vmem %s0, %s187
        %s189 = smul.u32 32, %s21
        %p190 = scmp.lt.s32.totalorder %s20, 3
        %s191 = scalar_select %p190, %s20, 3
        %s192 = smul.addr %s191, 32
        %s193 = smul.addr %s192, 4
        %s194 = scalar_lea.vmem %s1, %s193
        %s195 = smul.u32 32, %s21
        %v197 = vld [vmem:[%s188] sm:$0xff]
        %v198 = vld [vmem:[%s188 + $0x8] sm:$0xff]
        %v199 = vld [vmem:[%s188 + $0x10] sm:$0xff]
        %v200 = vld [vmem:[%s188 + $0x18] sm:$0xff]
        %v201 = vld [vmem:[%s188 + $0x20] sm:$0xff]
        %v202 = vld [vmem:[%s188 + $0x28] sm:$0xff]
        %v203 = vld [vmem:[%s188 + $0x30] sm:$0xff]
        %v204 = vld [vmem:[%s188 + $0x38] sm:$0xff]
        %v205 = vld [vmem:[%s188 + $0x40] sm:$0xff]
        %v206 = vld [vmem:[%s188 + $0x48] sm:$0xff]
        %v207 = vld [vmem:[%s188 + $0x50] sm:$0xff]
        %v208 = vld [vmem:[%s188 + $0x58] sm:$0xff]
        %v209 = vld [vmem:[%s188 + $0x60] sm:$0xff]
        %v210 = vld [vmem:[%s188 + $0x68] sm:$0xff]
        %v211 = vld [vmem:[%s188 + $0x70] sm:$0xff]
        %v212 = vld [vmem:[%s188 + $0x78] sm:$0xff]
        %v213 = vld [vmem:[%s188 + $0x80] sm:$0xff]
        %v214 = vld [vmem:[%s188 + $0x88] sm:$0xff]
        %v215 = vld [vmem:[%s188 + $0x90] sm:$0xff]
        %v216 = vld [vmem:[%s188 + $0x98] sm:$0xff]
        %v217 = vld [vmem:[%s188 + $0xa0] sm:$0xff]
        %v218 = vld [vmem:[%s188 + $0xa8] sm:$0xff]
        %v219 = vld [vmem:[%s188 + $0xb0] sm:$0xff]
        %v220 = vld [vmem:[%s188 + $0xb8] sm:$0xff]
        %v221 = vld [vmem:[%s188 + $0xc0] sm:$0xff]
        %v222 = vld [vmem:[%s188 + $0xc8] sm:$0xff]
        %v223 = vld [vmem:[%s188 + $0xd0] sm:$0xff]
        %v224 = vld [vmem:[%s188 + $0xd8] sm:$0xff]
        %v225 = vld [vmem:[%s188 + $0xe0] sm:$0xff]
        %v226 = vld [vmem:[%s188 + $0xe8] sm:$0xff]
        %v227 = vld [vmem:[%s188 + $0xf0] sm:$0xff]
        %v228 = vld [vmem:[%s188 + $0xf8] sm:$0xff]
        %v229 = vld [vmem:[%s188 + $0x100] sm:$0xff]
        %v230 = vld [vmem:[%s188 + $0x108] sm:$0xff]
        %v231 = vld [vmem:[%s188 + $0x110] sm:$0xff]
        %v232 = vld [vmem:[%s188 + $0x118] sm:$0xff]
        %v233 = vld [vmem:[%s188 + $0x120] sm:$0xff]
        %v234 = vld [vmem:[%s188 + $0x128] sm:$0xff]
        %v235 = vld [vmem:[%s188 + $0x130] sm:$0xff]
        %v236 = vld [vmem:[%s188 + $0x138] sm:$0xff]
        %v237 = vld [vmem:[%s188 + $0x140] sm:$0xff]
        %v238 = vld [vmem:[%s188 + $0x148] sm:$0xff]
        %v239 = vld [vmem:[%s188 + $0x150] sm:$0xff]
        %v240 = vld [vmem:[%s188 + $0x158] sm:$0xff]
        %v241 = vld [vmem:[%s188 + $0x160] sm:$0xff]
        %v242 = vld [vmem:[%s188 + $0x168] sm:$0xff]
        %v243 = vld [vmem:[%s188 + $0x170] sm:$0xff]
        %v244 = vld [vmem:[%s188 + $0x178] sm:$0xff]
        %v245 = vld [vmem:[%s188 + $0x180] sm:$0xff]
        %v246 = vld [vmem:[%s188 + $0x188] sm:$0xff]
        %v247 = vld [vmem:[%s188 + $0x190] sm:$0xff]
        %v248 = vld [vmem:[%s188 + $0x198] sm:$0xff]
        %v249 = vld [vmem:[%s188 + $0x1a0] sm:$0xff]
        %v250 = vld [vmem:[%s188 + $0x1a8] sm:$0xff]
        %v251 = vld [vmem:[%s188 + $0x1b0] sm:$0xff]
        %v252 = vld [vmem:[%s188 + $0x1b8] sm:$0xff]
        %v253 = vld [vmem:[%s188 + $0x1c0] sm:$0xff]
        %v254 = vld [vmem:[%s188 + $0x1c8] sm:$0xff]
        %v255 = vld [vmem:[%s188 + $0x1d0] sm:$0xff]
        %v256 = vld [vmem:[%s188 + $0x1d8] sm:$0xff]
        %v257 = vld [vmem:[%s188 + $0x1e0] sm:$0xff]
        %v258 = vld [vmem:[%s188 + $0x1e8] sm:$0xff]
        %v259 = vld [vmem:[%s188 + $0x1f0] sm:$0xff]
        %v260 = vld [vmem:[%s188 + $0x1f8] sm:$0xff]
        %v261 = vpack.c.bf16 %v199, %v197
        %v262 = vpack.c.bf16 %v200, %v198
        %v263 = vpack.c.bf16 %v203, %v201
        %v264 = vpack.c.bf16 %v204, %v202
        %v265 = vpack.c.bf16 %v207, %v205
        %v266 = vpack.c.bf16 %v208, %v206
        %v267 = vpack.c.bf16 %v211, %v209
        %v268 = vpack.c.bf16 %v212, %v210
        %v269 = vpack.c.bf16 %v215, %v213
        %v270 = vpack.c.bf16 %v216, %v214
        %v271 = vpack.c.bf16 %v219, %v217
        %v272 = vpack.c.bf16 %v220, %v218
        %v273 = vpack.c.bf16 %v223, %v221
        %v274 = vpack.c.bf16 %v224, %v222
        %v275 = vpack.c.bf16 %v227, %v225
        %v276 = vpack.c.bf16 %v228, %v226
        %v277 = vpack.c.bf16 %v231, %v229
        %v278 = vpack.c.bf16 %v232, %v230
        %v279 = vpack.c.bf16 %v235, %v233
        %v280 = vpack.c.bf16 %v236, %v234
        %v281 = vpack.c.bf16 %v239, %v237
        %v282 = vpack.c.bf16 %v240, %v238
        %v283 = vpack.c.bf16 %v243, %v241
        %v284 = vpack.c.bf16 %v244, %v242
        %v285 = vpack.c.bf16 %v247, %v245
        %v286 = vpack.c.bf16 %v248, %v246
        %v287 = vpack.c.bf16 %v251, %v249
        %v288 = vpack.c.bf16 %v252, %v250
        %v289 = vpack.c.bf16 %v255, %v253
        %v290 = vpack.c.bf16 %v256, %v254
        %v291 = vpack.c.bf16 %v259, %v257
        %v292 = vpack.c.bf16 %v260, %v258
        %v293 = vld [vmem:[%s194] sm:$0xf]
        %v294 = vld [vmem:[%s194 + $0x4] sm:$0xf]
        %v295 = vld [vmem:[%s194 + $0x8] sm:$0xf]
        %v296 = vld [vmem:[%s194 + $0xc] sm:$0xf]
        %v297 = vld [vmem:[%s194 + $0x10] sm:$0xf]
        %v298 = vld [vmem:[%s194 + $0x14] sm:$0xf]
        %v299 = vld [vmem:[%s194 + $0x18] sm:$0xf]
        %v300 = vld [vmem:[%s194 + $0x1c] sm:$0xf]
        %v301 = vld [vmem:[%s194 + $0x20] sm:$0xf]
        %v302 = vld [vmem:[%s194 + $0x24] sm:$0xf]
        %v303 = vld [vmem:[%s194 + $0x28] sm:$0xf]
        %v304 = vld [vmem:[%s194 + $0x2c] sm:$0xf]
        %v305 = vld [vmem:[%s194 + $0x30] sm:$0xf]
        %v306 = vld [vmem:[%s194 + $0x34] sm:$0xf]
        %v307 = vld [vmem:[%s194 + $0x38] sm:$0xf]
        %v308 = vld [vmem:[%s194 + $0x3c] sm:$0xf]
        %v309 = vld [vmem:[%s194 + $0x40] sm:$0xf]
        %v310 = vld [vmem:[%s194 + $0x44] sm:$0xf]
        %v311 = vld [vmem:[%s194 + $0x48] sm:$0xf]
        %v312 = vld [vmem:[%s194 + $0x4c] sm:$0xf]
        %v313 = vld [vmem:[%s194 + $0x50] sm:$0xf]
        %v314 = vld [vmem:[%s194 + $0x54] sm:$0xf]
        %v315 = vld [vmem:[%s194 + $0x58] sm:$0xf]
        %v316 = vld [vmem:[%s194 + $0x5c] sm:$0xf]
        %v317 = vld [vmem:[%s194 + $0x60] sm:$0xf]
        %v318 = vld [vmem:[%s194 + $0x64] sm:$0xf]
        %v319 = vld [vmem:[%s194 + $0x68] sm:$0xf]
        %v320 = vld [vmem:[%s194 + $0x6c] sm:$0xf]
        %v321 = vld [vmem:[%s194 + $0x70] sm:$0xf]
        %v322 = vld [vmem:[%s194 + $0x74] sm:$0xf]
        %v323 = vld [vmem:[%s194 + $0x78] sm:$0xf]
        %v324 = vld [vmem:[%s194 + $0x7c] sm:$0xf]
        %v357 = vunpack.c.l.b16 %v293
        %v358 = vunpack.c.l.b16 %v294
        %v359 = vunpack.c.l.b16 %v295
        %v360 = vunpack.c.l.b16 %v296
        %v361 = vunpack.c.l.b16 %v297
        %v362 = vunpack.c.l.b16 %v298
        %v363 = vunpack.c.l.b16 %v299
        %v364 = vunpack.c.l.b16 %v300
        %v365 = vunpack.c.l.b16 %v301
        %v366 = vunpack.c.l.b16 %v302
        %v367 = vunpack.c.l.b16 %v303
        %v368 = vunpack.c.l.b16 %v304
        %v369 = vunpack.c.l.b16 %v305
        %v370 = vunpack.c.l.b16 %v306
        %v371 = vunpack.c.l.b16 %v307
        %v372 = vunpack.c.l.b16 %v308
        %v373 = vunpack.c.l.b16 %v309
        %v374 = vunpack.c.l.b16 %v310
        %v375 = vunpack.c.l.b16 %v311
        %v376 = vunpack.c.l.b16 %v312
        %v377 = vunpack.c.l.b16 %v313
        %v378 = vunpack.c.l.b16 %v314
        %v379 = vunpack.c.l.b16 %v315
        %v380 = vunpack.c.l.b16 %v316
        %v381 = vunpack.c.l.b16 %v317
        %v382 = vunpack.c.l.b16 %v318
        %v383 = vunpack.c.l.b16 %v319
        %v384 = vunpack.c.l.b16 %v320
        %v385 = vunpack.c.l.b16 %v321
        %v386 = vunpack.c.l.b16 %v322
        %v387 = vunpack.c.l.b16 %v323
        %v388 = vunpack.c.l.b16 %v324
        %v389 = vpack.c.b16 %v358, %v357
        %v390 = vpack.c.b16 %v360, %v359
        %v391 = vpack.c.b16 %v362, %v361
        %v392 = vpack.c.b16 %v364, %v363
        %v393 = vpack.c.b16 %v366, %v365
        %v394 = vpack.c.b16 %v368, %v367
        %v395 = vpack.c.b16 %v370, %v369
        %v396 = vpack.c.b16 %v372, %v371
        %v397 = vpack.c.b16 %v374, %v373
        %v398 = vpack.c.b16 %v376, %v375
        %v399 = vpack.c.b16 %v378, %v377
        %v400 = vpack.c.b16 %v380, %v379
        %v401 = vpack.c.b16 %v382, %v381
        %v402 = vpack.c.b16 %v384, %v383
        %v403 = vpack.c.b16 %v386, %v385
        %v404 = vpack.c.b16 %v388, %v387
        %421 = vmatprep.subr.bf16.mxu0 0
        %422 = vmatpush1.bf16.msra.mxu0 %v396
        %423 = vmatprep.subr.bf16.mxu0 0
        %424 = vmatpush1.bf16.msra.mxu0 %v395
        %425 = vmatprep.subr.bf16.mxu0 0
        %426 = vmatpush1.bf16.msra.mxu0 %v394
        %427 = vmatprep.subr.bf16.mxu0 0
        %428 = vmatpush1.bf16.msra.mxu0 %v393
        %429 = vmatprep.subr.bf16.mxu0 0
        %430 = vmatpush1.bf16.msra.mxu0 %v392
        %431 = vmatprep.subr.bf16.mxu0 0
        %432 = vmatpush1.bf16.msra.mxu0 %v391
        %433 = vmatprep.subr.bf16.mxu0 0
        %434 = vmatpush1.bf16.msra.mxu0 %v390
        %435 = vmatprep.subr.bf16.mxu0 0
        %436 = vmatpush1.bf16.msra.mxu0 %v389
        %437 = vmatprep.subr.bf16.mxu0 0
        %438 = vmatpush2.bf16.msra.mxu0 %v404
        %439 = vmatprep.subr.bf16.mxu0 0
        %440 = vmatpush2.bf16.msra.mxu0 %v403
        %441 = vmatprep.subr.bf16.mxu0 0
        %442 = vmatpush2.bf16.msra.mxu0 %v402
        %443 = vmatprep.subr.bf16.mxu0 0
        %444 = vmatpush2.bf16.msra.mxu0 %v401
        %445 = vmatprep.subr.bf16.mxu0 0
        %446 = vmatpush2.bf16.msra.mxu0 %v400
        %447 = vmatprep.subr.bf16.mxu0 0
        %448 = vmatpush2.bf16.msra.mxu0 %v399
        %449 = vmatprep.subr.bf16.mxu0 0
        %450 = vmatpush2.bf16.msra.mxu0 %v398
        %451 = vmatprep.subr.bf16.mxu0 0
        %452 = vmatpush2.bf16.msra.mxu0 %v397
        %453 = vmatprep.mubr.bf16.mxu0 %v262
        %454 = vmatmul.mubr.bf16.gmra.mxu0 %v261
        %v455 = vpop.f32.mrf.mxu0
        %v456 = vadd.f32 0.0, %v455
        %v457 = vpop.f32.mrf.mxu0
        %v458 = vpop.f32.mrf.mxu0
        %v459 = vadd.f32 0.0, %v458
        %v460 = vpop.f32.mrf.mxu0
        %461 = vmatprep.mubr.bf16.mxu0 %v264
        %462 = vmatmul.mubr.bf16.gmra.mxu0 %v263
        %v463 = vpop.f32.mrf.mxu0
        %v464 = vadd.f32 0.0, %v463
        %v465 = vpop.f32.mrf.mxu0
        %v466 = vpop.f32.mrf.mxu0
        %v467 = vadd.f32 0.0, %v466
        %v468 = vpop.f32.mrf.mxu0
        %469 = vmatprep.mubr.bf16.mxu0 %v266
        %470 = vmatmul.mubr.bf16.gmra.mxu0 %v265
        %v471 = vpop.f32.mrf.mxu0
        %v472 = vadd.f32 0.0, %v471
        %v473 = vpop.f32.mrf.mxu0
        %v474 = vpop.f32.mrf.mxu0
        %v475 = vadd.f32 0.0, %v474
        %v476 = vpop.f32.mrf.mxu0
        %477 = vmatprep.mubr.bf16.mxu0 %v268
        %478 = vmatmul.mubr.bf16.gmra.mxu0 %v267
        %v479 = vpop.f32.mrf.mxu0
        %v480 = vadd.f32 0.0, %v479
        %v481 = vpop.f32.mrf.mxu0
        %v482 = vpop.f32.mrf.mxu0
        %v483 = vadd.f32 0.0, %v482
        %v484 = vpop.f32.mrf.mxu0
        %485 = vmatprep.mubr.bf16.mxu0 %v270
        %486 = vmatmul.mubr.bf16.gmra.mxu0 %v269
        %v487 = vpop.f32.mrf.mxu0
        %v488 = vadd.f32 0.0, %v487
        %v489 = vpop.f32.mrf.mxu0
        %v490 = vpop.f32.mrf.mxu0
        %v491 = vadd.f32 0.0, %v490
        %v492 = vpop.f32.mrf.mxu0
        %493 = vmatprep.mubr.bf16.mxu0 %v272
        %494 = vmatmul.mubr.bf16.gmra.mxu0 %v271
        %v495 = vpop.f32.mrf.mxu0
        %v496 = vadd.f32 0.0, %v495
        %v497 = vpop.f32.mrf.mxu0
        %v498 = vpop.f32.mrf.mxu0
        %v499 = vadd.f32 0.0, %v498
        %v500 = vpop.f32.mrf.mxu0
        %501 = vmatprep.mubr.bf16.mxu0 %v274
        %502 = vmatmul.mubr.bf16.gmra.mxu0 %v273
        %v503 = vpop.f32.mrf.mxu0
        %v504 = vadd.f32 0.0, %v503
        %v505 = vpop.f32.mrf.mxu0
        %v506 = vpop.f32.mrf.mxu0
        %v507 = vadd.f32 0.0, %v506
        %v508 = vpop.f32.mrf.mxu0
        %509 = vmatprep.mubr.bf16.mxu0 %v276
        %510 = vmatmul.mubr.bf16.gmra.mxu0 %v275
        %v511 = vpop.f32.mrf.mxu0
        %v512 = vadd.f32 0.0, %v511
        %v513 = vpop.f32.mrf.mxu0
        %v514 = vpop.f32.mrf.mxu0
        %v515 = vadd.f32 0.0, %v514
        %v516 = vpop.f32.mrf.mxu0
        %517 = vmatprep.mubr.bf16.mxu0 %v278
        %518 = vmatmul.mubr.bf16.gmra.mxu0 %v277
        %v519 = vpop.f32.mrf.mxu0
        %v520 = vadd.f32 0.0, %v519
        %v521 = vpop.f32.mrf.mxu0
        %v522 = vpop.f32.mrf.mxu0
        %v523 = vadd.f32 0.0, %v522
        %v524 = vpop.f32.mrf.mxu0
        %525 = vmatprep.mubr.bf16.mxu0 %v280
        %526 = vmatmul.mubr.bf16.gmra.mxu0 %v279
        %v527 = vpop.f32.mrf.mxu0
        %v528 = vadd.f32 0.0, %v527
        %v529 = vpop.f32.mrf.mxu0
        %v530 = vpop.f32.mrf.mxu0
        %v531 = vadd.f32 0.0, %v530
        %v532 = vpop.f32.mrf.mxu0
        %533 = vmatprep.mubr.bf16.mxu0 %v282
        %534 = vmatmul.mubr.bf16.gmra.mxu0 %v281
        %v535 = vpop.f32.mrf.mxu0
        %v536 = vadd.f32 0.0, %v535
        %v537 = vpop.f32.mrf.mxu0
        %v538 = vpop.f32.mrf.mxu0
        %v539 = vadd.f32 0.0, %v538
        %v540 = vpop.f32.mrf.mxu0
        %541 = vmatprep.mubr.bf16.mxu0 %v284
        %542 = vmatmul.mubr.bf16.gmra.mxu0 %v283
        %v543 = vpop.f32.mrf.mxu0
        %v544 = vadd.f32 0.0, %v543
        %v545 = vpop.f32.mrf.mxu0
        %v546 = vpop.f32.mrf.mxu0
        %v547 = vadd.f32 0.0, %v546
        %v548 = vpop.f32.mrf.mxu0
        %549 = vmatprep.mubr.bf16.mxu0 %v286
        %550 = vmatmul.mubr.bf16.gmra.mxu0 %v285
        %v551 = vpop.f32.mrf.mxu0
        %v552 = vadd.f32 0.0, %v551
        %v553 = vpop.f32.mrf.mxu0
        %v554 = vpop.f32.mrf.mxu0
        %v555 = vadd.f32 0.0, %v554
        %v556 = vpop.f32.mrf.mxu0
        %557 = vmatprep.mubr.bf16.mxu0 %v288
        %558 = vmatmul.mubr.bf16.gmra.mxu0 %v287
        %v559 = vpop.f32.mrf.mxu0
        %v560 = vadd.f32 0.0, %v559
        %v561 = vpop.f32.mrf.mxu0
        %v562 = vpop.f32.mrf.mxu0
        %v563 = vadd.f32 0.0, %v562
        %v564 = vpop.f32.mrf.mxu0
        %565 = vmatprep.mubr.bf16.mxu0 %v290
        %566 = vmatmul.mubr.bf16.gmra.mxu0 %v289
        %v567 = vpop.f32.mrf.mxu0
        %v568 = vadd.f32 0.0, %v567
        %v569 = vpop.f32.mrf.mxu0
        %v570 = vpop.f32.mrf.mxu0
        %v571 = vadd.f32 0.0, %v570
        %v572 = vpop.f32.mrf.mxu0
        %573 = vmatprep.mubr.bf16.mxu0 %v292
        %574 = vmatmul.mubr.bf16.gmra.mxu0 %v291
        %v575 = vpop.f32.mrf.mxu0
        %v576 = vadd.f32 0.0, %v575
        %v577 = vpop.f32.mrf.mxu0
        %v578 = vpop.f32.mrf.mxu0
        %v579 = vadd.f32 0.0, %v578
        %v580 = vpop.f32.mrf.mxu0
        %581 = vdwg.mxu0
        %v582 = vmax.f32 %v456, 0.0
        %v583 = vmax.f32 %v459, 0.0
        %v584 = vmax.f32 %v464, 0.0
        %v585 = vmax.f32 %v467, 0.0
        %v586 = vmax.f32 %v472, 0.0
        %v587 = vmax.f32 %v475, 0.0
        %v588 = vmax.f32 %v480, 0.0
        %v589 = vmax.f32 %v483, 0.0
        %v590 = vmax.f32 %v488, 0.0
        %v591 = vmax.f32 %v491, 0.0
        %v592 = vmax.f32 %v496, 0.0
        %v593 = vmax.f32 %v499, 0.0
        %v594 = vmax.f32 %v504, 0.0
        %v595 = vmax.f32 %v507, 0.0
        %v596 = vmax.f32 %v512, 0.0
        %v597 = vmax.f32 %v515, 0.0
        %v598 = vmax.f32 %v520, 0.0
        %v599 = vmax.f32 %v523, 0.0
        %v600 = vmax.f32 %v528, 0.0
        %v601 = vmax.f32 %v531, 0.0
        %v602 = vmax.f32 %v536, 0.0
        %v603 = vmax.f32 %v539, 0.0
        %v604 = vmax.f32 %v544, 0.0
        %v605 = vmax.f32 %v547, 0.0
        %v606 = vmax.f32 %v552, 0.0
        %v607 = vmax.f32 %v555, 0.0
        %v608 = vmax.f32 %v560, 0.0
        %v609 = vmax.f32 %v563, 0.0
        %v610 = vmax.f32 %v568, 0.0
        %v611 = vmax.f32 %v571, 0.0
        %v612 = vmax.f32 %v576, 0.0
        %v613 = vmax.f32 %v579, 0.0
        %614 = vst [vmem:[%s178] sm:$0xff] %v582
        %615 = vst [vmem:[%s178 + $0x8] sm:$0xff] %v583
        %616 = vst [vmem:[%s178 + $0x10] sm:$0xff] %v584
        %617 = vst [vmem:[%s178 + $0x18] sm:$0xff] %v585
        %618 = vst [vmem:[%s178 + $0x20] sm:$0xff] %v586
        %619 = vst [vmem:[%s178 + $0x28] sm:$0xff] %v587
        %620 = vst [vmem:[%s178 + $0x30] sm:$0xff] %v588
        %621 = vst [vmem:[%s178 + $0x38] sm:$0xff] %v589
        %622 = vst [vmem:[%s178 + $0x40] sm:$0xff] %v590
        %623 = vst [vmem:[%s178 + $0x48] sm:$0xff] %v591
        %624 = vst [vmem:[%s178 + $0x50] sm:$0xff] %v592
        %625 = vst [vmem:[%s178 + $0x58] sm:$0xff] %v593
        %626 = vst [vmem:[%s178 + $0x60] sm:$0xff] %v594
        %627 = vst [vmem:[%s178 + $0x68] sm:$0xff] %v595
        %628 = vst [vmem:[%s178 + $0x70] sm:$0xff] %v596
        %629 = vst [vmem:[%s178 + $0x78] sm:$0xff] %v597
        %630 = vst [vmem:[%s178 + $0x80] sm:$0xff] %v598
        %631 = vst [vmem:[%s178 + $0x88] sm:$0xff] %v599
        %632 = vst [vmem:[%s178 + $0x90] sm:$0xff] %v600
        %633 = vst [vmem:[%s178 + $0x98] sm:$0xff] %v601
        %634 = vst [vmem:[%s178 + $0xa0] sm:$0xff] %v602
        %635 = vst [vmem:[%s178 + $0xa8] sm:$0xff] %v603
        %636 = vst [vmem:[%s178 + $0xb0] sm:$0xff] %v604
        %637 = vst [vmem:[%s178 + $0xb8] sm:$0xff] %v605
        %638 = vst [vmem:[%s178 + $0xc0] sm:$0xff] %v606
        %639 = vst [vmem:[%s178 + $0xc8] sm:$0xff] %v607
        %640 = vst [vmem:[%s178 + $0xd0] sm:$0xff] %v608
        %641 = vst [vmem:[%s178 + $0xd8] sm:$0xff] %v609
        %642 = vst [vmem:[%s178 + $0xe0] sm:$0xff] %v610
        %643 = vst [vmem:[%s178 + $0xe8] sm:$0xff] %v611
        %644 = vst [vmem:[%s178 + $0xf0] sm:$0xff] %v612
        %645 = vst [vmem:[%s178 + $0xf8] sm:$0xff] %v613
        %s646 = sand.u32 %s92, 1
        %s647 = scalar_lea.sflag [#allocation3], %s646
        %s648 = sand.u32 %s92, 1
        %s649 = smul.addr %s648, 256
        %s650 = scalar_lea.vmem [#allocation2], %s649
        // Predicated region
        $region29: #{grcu_forward.5} parent=27 // pred_check
          %p651 = pneg %p102
        $region30: #{grcu_forward.5} parent=27 // pred_check_branch
          %653 = sbr.rel (%p651) target = $region32
        $region31: #{grcu_forward.5} parent=27 // pred_region
          %s654 = smul.u32 32, %s21
          %s656 = ssub.s32 4096, 4096
          %657 = vsyncadd %s647, %s656
          %s658 = smul.addr %s20, 32
          %s659 = sadd.s32 %s654, %s658
          %s660 = smul.addr %s659, 128
          %s661 = scalar_lea.hbm %s2, %s660
          %s662 = sshll.u32 %s650, 4
          %s663 = int_to_ptr.vmem [resolvable:$true] %s662
          %668 = dma.vmem_to_hbm [thread:$0]  %s663, 4096, %s661, %s647, 128, 128, 8
        $region32: #{grcu_forward.5} parent=27 // pred_fallthru
          _
      $region28: #{grcu_forward.5} parent=5 // pred_fallthru
        _
      %p669 = scmp.le.s32.totalorder 2, %s11
      // Predicated region
      $region33: #{grcu_forward.5} parent=5 // pred_check
        %p670 = pneg %p669
      $region34: #{grcu_forward.5} parent=5 // pred_check_branch
        %672 = sbr.rel (%p670) target = $region36
      $region35: #{grcu_forward.5} parent=5 // pred_region
        %s673 = ssub.s32 %s11, 2
        // Predicated region
        $region37: #{grcu_forward.5} parent=35 // pred_check
          %p674 = pneg %p108
        $region38: #{grcu_forward.5} parent=35 // pred_check_branch
          %676 = sbr.rel (%p674) target = $region40
        $region39: #{grcu_forward.5} parent=35 // pred_region
          %s677 = sand.u32 %s93, 1
          %s678 = scalar_lea.sflag [#allocation3], %s677
          %s679 = sand.u32 %s93, 1
          %s680 = smul.addr %s679, 256
          %s681 = scalar_lea.vmem [#allocation2], %s680
          %682 = dma.done %s678, 4096
        $region40: #{grcu_forward.5} parent=35 // pred_fallthru
          _
      $region36: #{grcu_forward.5} parent=5 // pred_fallthru
        _
    $region6: #{grcu_forward.5} parent=1 // loop_footer
      %s15 = sadd.s32 1, %s11
    $region7: #{grcu_forward.5} parent=1 // loop_footer_branch
      %10 = sbr.rel target = $region3
    $region8: #{grcu_forward.5} parent=1 // loop_exit
      _
    %683 = vsyncpa [#allocation3], 1
    %s684 = scalar_lea.sflag [#allocation3], 1
    %685 = vsyncpa %s684, 1

</llo_original>
